<compile_context>
chip_gen: v7x
topology: tpu7x:2x2x1
jax: 0.10.0
libtpu: 0.0.40
codegen_flags: <defaults>
</compile_context>

<pallas_src>
import functools
import math

import jax
import jax.numpy as jnp
import numpy as np
from jax.experimental import pallas as pl
from jax.experimental.pallas import tpu as pltpu

_LANE = 128
_MIN_PALLAS_BYTES = 1 << 20          # below ~1 MiB, XLA's fused multiply wins (launch overhead)
_MIN_MULTISTEP_BYTES = 256 << 10     # above this, force >= 4 grid steps
_MIN_GRID_STEPS = 4


def _round_up(x, m):
    return ((x + m - 1) // m) * m


def _cdiv(a, b):
    return -(-a // b)


def _sublane_granule(dtype):
    # f32 -> 8, bf16 -> 16, int8/fp8 -> 32 (sub-32-bit dtypes pack along sublanes)
    return max(8, 32 // jnp.dtype(dtype).itemsize)


@functools.lru_cache(maxsize=None)
def _vmem_capacity_bytes():
    try:
        cap = getattr(pltpu.get_tpu_info(), "vmem_capacity_bytes", None)
        if cap:
            return int(cap)
    except Exception:
        pass
    return 64 << 20                  # conservative default (v7x-sized VMEM)


def _vmem_limit_bytes():
    # v5e/v6e: 128 MiB physical VMEM -> allow 64 MiB scoped; v7x: 64 MiB -> 32 MiB.
    return (64 << 20) if _vmem_capacity_bytes() >= (100 << 20) else (32 << 20)


def _default_block_target_bytes():
    # Per-operand tile target.  Peak VMEM ~ (mask + weight + out) x 2 buffers
    # + f32 temps ~ 8-10x this target, comfortably under the scoped limit above.
    return (4 << 20) if _vmem_capacity_bytes() >= (100 << 20) else (2 << 20)


def _compiler_params(grid_rank):
    return pltpu.CompilerParams(
        dimension_semantics=("parallel",) * grid_rank,   # independent blocks -> megacore sharding
        vmem_limit_bytes=_vmem_limit_bytes(),
    )


# ---------------------------------------------------------------------------
# Tile selection
# ---------------------------------------------------------------------------
def _pick_row_tile(R, granule, row_bytes, block_target):
    """Largest granule-multiple row count whose block fits the per-operand
    target (full extent R - always a legal block dim - if everything fits)."""
    budget_rows = max(granule, (block_target // max(row_bytes, 1)) // granule * granule)
    return R if budget_rows >= R else budget_rows


def _shrink_rows(tr, granule):
    return max(granule, _round_up(tr // 2, granule))


def _dense_tiles(R, C, itemsize, granule, block_target, total_bytes):
    # Column tile: full C, unless a single granule-row stripe already exceeds
    # the per-operand target (robustness for very wide tensors).
    max_tc = max(_LANE, (block_target // (granule * itemsize)) // _LANE * _LANE)
    tc = C if C <= max_tc else max_tc
    tr = _pick_row_tile(R, granule, tc * itemsize, block_target)
    if total_bytes > _MIN_MULTISTEP_BYTES:
        # >= 4 grid steps so DMA-in / compute / DMA-out overlap and both v7x
        # TensorCores get work; prefer splitting rows, then columns.
        while _cdiv(R, tr) * _cdiv(C, tc) < _MIN_GRID_STEPS and tr > granule:
            tr = _shrink_rows(tr, granule)
        while _cdiv(R, tr) * _cdiv(C, tc) < _MIN_GRID_STEPS and tc > _LANE:
            tc = max(_LANE, ((tc // 2) // _LANE) * _LANE)
    return tr, tc


def _rowmask_row_tile(R, C, itemsize, granule, block_target, total_bytes):
    tr = _pick_row_tile(R, granule, C * itemsize, block_target)
    if total_bytes > _MIN_MULTISTEP_BYTES:
        while _cdiv(R, tr) < _MIN_GRID_STEPS and tr > granule:
            tr = _shrink_rows(tr, granule)
    return tr


# ---------------------------------------------------------------------------
# Kernel bodies (HBM-bandwidth bound; no VALU/MXU micro-tuning is worthwhile)
# ---------------------------------------------------------------------------
def _mul_kernel(m_ref, w_ref, o_ref):
    # Elementwise (or lane-broadcast, when m is (tr,1)) masked multiply.
    o_ref[...] = (m_ref[...] * w_ref[...]).astype(o_ref.dtype)


def _expand_mul_kernel(m_ref, e_ref, w_ref, o_ref):
    # Row-mask conv case on the lane-dense regrouped view (R, C=G*K):
    #   dense_mask[r, l] = mask[r, l // K] == (mask_block @ E)[r, l],
    # with E[j, l] = 1 iff l // K == j.  The expansion runs on the (idle) MXU so
    # the weight keeps its NATURAL contiguous layout - no wrapper transposes and
    # fully lane-dense loads/stores.  Exact: mask and E are 0/1, accumulated in f32.
    m_dense = jnp.dot(m_ref[...], e_ref[...], preferred_element_type=jnp.float32)
    o_ref[...] = (m_dense * w_ref[...]).astype(o_ref.dtype)


# ---------------------------------------------------------------------------
# pallas_call wrappers
# ---------------------------------------------------------------------------
def _lane_dense_view(n, leading):
    """A free (contiguous) 2D reshape (R, C) with C a multiple of 128, or None."""
    rest = n // leading
    if leading * rest == n and rest % _LANE == 0:
        return leading, rest
    for width in (8192, 4096, 2048, 1024, 512, 256, 128):
        if n % width == 0:
            return n // width, width
    return None


def _masked_mul_dense(mask, w, block_target, total_bytes):
    """Mask covers every element (2D tensors, or 4D with sub_kernel_granularity=4)."""
    n = w.size
    view = _lane_dense_view(n, w.shape[0])
    if view is None:
        return None
    R, C = view
    dtype = w.dtype
    itemsize = jnp.dtype(dtype).itemsize
    granule = _sublane_granule(dtype)
    tr, tc = _dense_tiles(R, C, itemsize, granule, block_target, total_bytes)
    grid = (pl.cdiv(R, tr), pl.cdiv(C, tc))
    out2d = pl.pallas_call(
        _mul_kernel,
        out_shape=jax.ShapeDtypeStruct((R, C), dtype),
        grid=grid,
        in_specs=[pl.BlockSpec((tr, tc), lambda i, j: (i, j)),
                  pl.BlockSpec((tr, tc), lambda i, j: (i, j))],
        out_specs=pl.BlockSpec((tr, tc), lambda i, j: (i, j)),
        compiler_params=_compiler_params(2),
    )(mask.reshape(R, C).astype(dtype),   # 0/1 mask: cast to weight dtype is exact, cuts read traffic
      w.reshape(R, C))
    return out2d.reshape(w.shape)


def _masked_mul_rowmask(mask_flat, w, M, K, block_target, total_bytes):
    """4D conv weight with sub_kernel_granularity < 4: mask over the leading
    M = prod(shape[:g]) rows, broadcast over the trailing K = prod(shape[g:])."""
    dtype = w.dtype
    itemsize = jnp.dtype(dtype).itemsize
    g0 = _LANE // math.gcd(K, _LANE)      # smallest group with G*K % 128 == 0

    if g0 == 1:
        # K already a multiple of 128: the natural (M, K) view is lane-dense;
        # broadcast the streamed (tr, 1) mask column across the K lanes.
        R, C, G = M, K, 1
        granule = _sublane_granule(dtype)
    else:
        if M % g0 != 0:
            return None                   # odd leading extent: let XLA's fused multiply handle it
        G = g0
        while G < 8 and M % (2 * G) == 0:
            G *= 2                        # keep the MXU contraction dim comfortable
        R, C = M // G, G * K
        granule = max(_sublane_granule(dtype), 16)   # mask/E travel as bf16

    if C * granule * itemsize > max(block_target, 1 << 20):
        return None                       # pathologically wide rows: jnp fallback

    tr = _rowmask_row_tile(R, C, itemsize, granule, block_target, total_bytes)
    grid = (pl.cdiv(R, tr),)
    w2d = w.reshape(R, C)                 # contiguous reshape: free, keeps natural layout

    if G == 1:
        out2d = pl.pallas_call(
            _mul_kernel,
            out_shape=jax.ShapeDtypeStruct((R, C), dtype),
            grid=grid,
            in_specs=[pl.BlockSpec((tr, 1), lambda i: (i, 0)),
                      pl.BlockSpec((tr, C), lambda i: (i, 0))],
            out_specs=pl.BlockSpec((tr, C), lambda i: (i, 0)),
            compiler_params=_compiler_params(1),
        )(mask_flat.reshape(R, 1).astype(dtype), w2d)
    else:
        # 0/1 mask and expansion matrix are exact in bf16; bf16 keeps the tiny
        # expansion matmul fast on the MXU and halves mask read traffic.
        # TODO(synk): cache `expand` (and the mask) per (G, K) at mask-update
        # time in a real training loop instead of rebuilding it per call.
        e = np.equal.outer(np.arange(G), np.arange(G * K) // K).astype(np.float32)
        expand = jnp.asarray(e, dtype=jnp.bfloat16)
        out2d = pl.pallas_call(
            _expand_mul_kernel,
            out_shape=jax.ShapeDtypeStruct((R, C), dtype),
            grid=grid,
            in_specs=[pl.BlockSpec((tr, G), lambda i: (i, 0)),
                      pl.BlockSpec((G, C), lambda i: (0, 0)),   # small, constant across steps
                      pl.BlockSpec((tr, C), lambda i: (i, 0))],
            out_specs=pl.BlockSpec((tr, C), lambda i: (i, 0)),
            compiler_params=_compiler_params(1),
        )(mask_flat.reshape(R, G).astype(jnp.bfloat16), expand, w2d)
    return out2d.reshape(w.shape)


# ---------------------------------------------------------------------------
# Wrapper reproducing SparseTensor.forward()
# ---------------------------------------------------------------------------
def sparse_tensor_forward(mask, s_tensor, sub_kernel_granularity=4, *,
                          min_pallas_bytes=None, block_target_bytes=None):
    assert s_tensor.ndim in (2, 4), "can only do 2D or 4D sparse tensors"
    shape = s_tensor.shape
    n = s_tensor.size
    itemsize = jnp.dtype(s_tensor.dtype).itemsize
    total_bytes = n * itemsize
    if min_pallas_bytes is None:
        min_pallas_bytes = _MIN_PALLAS_BYTES
    if block_target_bytes is None:
        block_target_bytes = _default_block_target_bytes()

    def _jnp_fallback():
        # XLA's fused broadcast-multiply is already at the HBM roofline for
        # small / oddly-shaped tensors; a standalone Pallas launch only adds
        # launch overhead there.
        if mask.size == n:
            return (mask.reshape(shape) * s_tensor).astype(s_tensor.dtype)
        bmask = mask.reshape(mask.shape + (1,) * (s_tensor.ndim - mask.ndim))
        return (bmask * s_tensor).astype(s_tensor.dtype)

    if total_bytes < min_pallas_bytes:
        return _jnp_fallback()

    if mask.size == n:
        out = _masked_mul_dense(mask, s_tensor, block_target_bytes, total_bytes)
    else:
        M = mask.size
        K = n // M
        out = _masked_mul_rowmask(mask.reshape(-1), s_tensor, M, K,
                                  block_target_bytes, total_bytes)
    return out if out is not None else _jnp_fallback()


# ---------------------------------------------------------------------------
# Deterministic parameter construction mirroring SparseTensor.__init__:
#   - s_tensor ~ Uniform(-stdv, stdv), stdv = 1/sqrt(prod(shape[1:]))
#   - mask: random subset of size int((1 - sparsity) * numel + 0.1) set to 1
#   - reinitialize_unused(zero): weights where (broadcast) mask < 0.5 -> 0
# ---------------------------------------------------------------------------
def init_sparse_tensor(key, tensor_size, initial_sparsity, sub_kernel_granularity=4):
    k_w, k_m = jax.random.split(key)
    stdv = 1.0 / math.sqrt(math.prod(tensor_size[1:]))
    s = jax.random.uniform(k_w, tensor_size, jnp.float32, minval=-stdv, maxval=stdv)

    mask_shape = tuple(tensor_size[:sub_kernel_granularity])
    n = math.prod(mask_shape)
    n_active = int((1.0 - initial_sparsity) * n + 0.1)
    perm = jax.random.permutation(k_m, n)
    mask_flat = jnp.zeros((n,), jnp.float32).at[perm[:n_active]].set(1.0)
    mask = mask_flat.reshape(mask_shape)

    n_trail = len(tensor_size) - sub_kernel_granularity
    bmask = mask.reshape(mask_shape + (1,) * max(n_trail, 0))
    s = jnp.where(bmask > 0.5, s, 0.0)    # reinitialize_unused_to_zero=True
    return mask, s


if __name__ == "__main__":
    key = jax.random.PRNGKey(0)
    keys = jax.random.split(key, 10)

    def ref_forward(mask, w, g):
        if w.ndim == 4 and mask.size != w.size:
            return (mask.reshape(mask.shape + (1,) * (4 - g)) * w).astype(w.dtype)
        return (mask.reshape(w.shape) * w).astype(w.dtype)

    def check(name, mask, w, g, **kw):
        out = sparse_tensor_forward(mask, w, sub_kernel_granularity=g, **kw)
        out = jax.block_until_ready(out)
        ref = ref_forward(mask, w, g)
        assert out.shape == w.shape and out.dtype == w.dtype, name
        assert jnp.allclose(out.astype(jnp.float32), ref.astype(jnp.float32)), \
            f"mismatch in {name}"

    # (a) realistic conv weight, g=2 -> lane-dense regrouped path, natural threshold
    m, w = init_sparse_tensor(keys[0], (256, 256, 3, 3), 0.5, 2)
    check("conv_g2_large", m, w, 2)

    # (b) g=2 with a non-divisible row grid -> partial last block in the regrouped view
    m, w = init_sparse_tensor(keys[1], (104, 64, 3, 3), 0.5, 2)
    check("conv_g2_partial", m, w, 2, min_pallas_bytes=0, block_target_bytes=64 * 1024)

    # (c) g=1 -> small expansion group (G=8), forced Pallas path
    m, w = init_sparse_tensor(keys[2], (64, 32, 3, 3), 0.9, 1)
    check("conv_g1_expand", m, w, 1, min_pallas_bytes=0, block_target_bytes=128 * 1024)

    # (d) g=1 with K % 128 == 0 -> direct (tr,1) lane-broadcast kernel (no matmul)
    m, w = init_sparse_tensor(keys[3], (64, 128, 3, 3), 0.7, 1)
    check("conv_g1_bcast", m, w, 1, min_pallas_bytes=0)

    # (e) g=4 per-element mask -> dense path on a lane-dense flattened view
    m, w = init_sparse_tensor(keys[4], (32, 16, 3, 3), 0.5, 4)
    check("conv_g4_dense", m, w, 4, min_pallas_bytes=0)

    # (f) 2D FC weight -> dense path, >=4-step row-tiled grid
    m, w = init_sparse_tensor(keys[5], (512, 1024), 0.7, 4)
    check("fc_dense", m, w, 4)

    # (g) very wide 2D weight -> column tiling keeps blocks within the VMEM budget
    m, w = init_sparse_tensor(keys[6], (8, 65536), 0.5, 4)
    check("fc_wide_coltile", m, w, 4)

    # (h) bf16 weights: mask cast to bf16 in the wrapper (halves mask read traffic)
    m, w = init_sparse_tensor(keys[7], (256, 2048), 0.5, 4)
    check("fc_bf16", m, w.astype(jnp.bfloat16), 4)

    # (i) tiny / oddly-shaped tensors -> fused-XLA fast path (no standalone launch)
    m, w = init_sparse_tensor(keys[8], (8, 4, 3, 3), 0.5, 2)
    check("tiny_fastpath", m, w, 2)
    m, w = init_sparse_tensor(keys[9], (72, 40, 3, 3), 0.5, 2)   # M % 128 != 0
    check("odd_shape_fallback", m, w, 2, min_pallas_bytes=0)

    print("KERNEL_OK")
</pallas_src>

<mosaic_0001>
module attributes {stable_mosaic.version = 11 : i64} {
  func.func @_expand_mul_kernel(%arg0: i32, %arg1: memref<112x128xbf16, #tpu.memory_space<vmem>>, %arg2: memref<128x1152xbf16, #tpu.memory_space<vmem>>, %arg3: memref<112x1152xf32, #tpu.memory_space<vmem>>, %arg4: memref<112x1152xf32, #tpu.memory_space<vmem>>) attributes {dimension_semantics = [#tpu.dimension_semantics<parallel>], iteration_bounds = array<i64: 5>, scalar_prefetch = 0 : i64, scratch_operands = 0 : i64, tpu.core_type = #tpu.core_type<tc>, window_params = [{transform_indices = @transform_0, window_bounds = array<i64: 112, 128>}, {pipeline_mode = #tpu.pipeline_mode<synchronous>, transform_indices = @transform_1, window_bounds = array<i64: 128, 1152>}, {transform_indices = @transform_2, window_bounds = array<i64: 112, 1152>}, {transform_indices = @transform_3, window_bounds = array<i64: 112, 1152>}]} {
    %c0 = arith.constant 0 : index
    %c0_0 = arith.constant 0 : index
    %0 = vector.load %arg1[%c0, %c0_0] : memref<112x128xbf16, #tpu.memory_space<vmem>>, vector<112x128xbf16>
    %c0_1 = arith.constant 0 : index
    %c0_2 = arith.constant 0 : index
    %1 = vector.load %arg2[%c0_1, %c0_2] : memref<128x1152xbf16, #tpu.memory_space<vmem>>, vector<128x1152xbf16>
    %cst = arith.constant dense<0.000000e+00> : vector<112x1152xf32>
    %2 = tpu.matmul %0, %1, %cst {dimension_numbers = #tpu.dot_dimension_numbers<[1], [0], [0], [1], [0, 0, 1, 1], [], []>} : vector<112x128xbf16>, vector<128x1152xbf16>, vector<112x1152xf32> -> vector<112x1152xf32>
    %c0_3 = arith.constant 0 : index
    %c0_4 = arith.constant 0 : index
    %3 = vector.load %arg3[%c0_3, %c0_4] : memref<112x1152xf32, #tpu.memory_space<vmem>>, vector<112x1152xf32>
    %4 = arith.mulf %2, %3 : vector<112x1152xf32>
    %c0_5 = arith.constant 0 : index
    %c0_6 = arith.constant 0 : index
    %5 = vector.load %arg4[%c0_5, %c0_6] : memref<112x1152xf32, #tpu.memory_space<vmem>>, vector<112x1152xf32>
    tpu.vector_store %arg4[%c0_5, %c0_6], %4 {strides = array<i32>} : memref<112x1152xf32, #tpu.memory_space<vmem>>, vector<112x1152xf32>,
    return
  }
  func.func @transform_0(%arg0: i32) -> (i32, i32) {
    %c0_i32 = arith.constant 0 : i32
    %c0_i32_0 = arith.constant 0 : i32
    return %arg0, %c0_i32 : i32, i32
  }
  func.func @transform_1(%arg0: i32) -> (i32, i32) {
    %c0_i32 = arith.constant 0 : i32
    %c0_i32_0 = arith.constant 0 : i32
    %c0_i32_1 = arith.constant 0 : i32
    return %c0_i32, %c0_i32_0 : i32, i32
  }
  func.func @transform_2(%arg0: i32) -> (i32, i32) {
    %c0_i32 = arith.constant 0 : i32
    %c0_i32_0 = arith.constant 0 : i32
    return %arg0, %c0_i32 : i32, i32
  }
  func.func @transform_3(%arg0: i32) -> (i32, i32) {
    %c0_i32 = arith.constant 0 : i32
    %c0_i32_0 = arith.constant 0 : i32
    return %arg0, %c0_i32 : i32, i32
  }
}

</mosaic_0001>

<llo_original>
// kernel: tpu_custom_call.1
$region0: #{tpu_custom_call.1}
  #allocation0 [shape = 'u32[]', space=smem, size = 0x4, offset = 0x4, fixed_abs, tag = 'smem constant byte address 0x4 - core index']
  #allocation1 [shape = 'u32[144,128]{1,0:T(1,128)}', space=vmem, size = 0x12000, scoped, tag = 'internal scratch']
  %s0 = inlined_call_operand.hbm [shape: bf16[512,128], index: 0, kind: input, shape index: {}]
  %s1 = inlined_call_operand.hbm [shape: bf16[128,1152], index: 1, kind: input, shape index: {}]
  %s2 = inlined_call_operand.hbm [shape: f32[512,1152], index: 2, kind: input, shape index: {}]
  %s3 = inlined_call_operand.hbm [shape: f32[512,1152], index: 3, kind: output, shape index: {}]
  %s4 = sld [smem:[#allocation0]]
  $region57: #{tpu_custom_call.1} parent=0
    _
  %s6 = ssub.s32 1, %s4
  %s7 = scalar_select 0, %s6, %s4
  $region1: #{tpu_custom_call.1} parent=0
    #allocation2 [shape = 'u8[57344]{0}', space=vmem, size = 0xe000, scoped, tag = 'input window, operand 0']
    #allocation3 [shape = 's32[2]{0}', space=sflag, size = 0x8, scoped, tag = 'scoped memory for tpu_custom_call.1']
    #allocation4 [shape = 's32[2]{0}', space=sflag, size = 0x8, scoped, tag = 'scoped memory for tpu_custom_call.1']
    #allocation5 [shape = 'u8[294912]{0}', space=vmem, size = 0x48000, scoped, tag = 'input window, operand 1, single buffered']
    #allocation6 [shape = 's32[1]{0}', space=sflag, size = 0x4, scoped, tag = 'scoped memory for tpu_custom_call.1']
    #allocation7 [shape = 'u8[1032192]{0}', space=vmem, size = 0xfc000, scoped, tag = 'input window, operand 2']
    #allocation8 [shape = 'u8[1032192]{0}', space=vmem, size = 0xfc000, scoped, tag = 'output window, operand 0']
    %8 = vsyncpa [#allocation3], 0
    %s9 = scalar_lea.sflag [#allocation3], 1
    %10 = vsyncpa %s9, 0
    %11 = vsyncpa [#allocation6], 0
    %12 = vsyncpa [#allocation4], 0
    %s13 = scalar_lea.sflag [#allocation4], 1
    %14 = vsyncpa %s13, 0
    loop: start=0, step=1, limit=7
    $region2: #{tpu_custom_call.1} parent=1 // loop_pre_header
      _
    $region3: #{tpu_custom_call.1} parent=1 // loop_header
      %s16 = sphi 0, %s20
      %p17 = scmp.ge.s32.totalorder %s16, 7
      %s26 = sphi 0, %s28
      %s29 = sphi 0, %s26
      %s30 = sphi 0, %s29
      %s46 = sphi 0, %s30
      %s50 = sphi 0, %s50
      %s52 = sphi 0, %s50
      %s53 = sphi 0, %s52
      %s67 = sphi 0, %s53
      %s73 = sphi 0, %s75
      %s76 = sphi 0, %s73
      %s77 = sphi 0, %s76
      %s93 = sphi 0, %s77
      %s99 = sphi 0, %s101
      %s102 = sphi 0, %s99
      %s103 = sphi 0, %s102
      %s119 = sphi 0, %s103
    $region4: #{tpu_custom_call.1} parent=1 // loop_header_branch
      %19 = sbr.rel (%p17) target = $region8
    $region5: #{tpu_custom_call.1} parent=1 // loop_body
      %s21 = ssub.s32 %s16, 1
      %s22 = ssub.s32 %s16, 2
      %s23 = sadd.s32 %s16, 1
      %s24 = ssub.s32 %s16, %s23
      %p25 = scmp.eq.s32.totalorder %s24, 0
      %s27 = sadd.s32 %s26, 1
      %s28 = scalar_select %p25, %s26, %s27
      %p31 = pneg %p25
      %p32 = scmp.eq.s32.totalorder %s16, 4
      %p33 = por %p31, %p32
      %p34 = scmp.ne.s32.totalorder %s26, %s29
      %p35 = scmp.eq.s32.totalorder %s16, 0
      %p36 = por %p34, %p35
      %p37 = scmp.ne.s32.totalorder %s26, %s29
      %p38 = scmp.eq.s32.totalorder %s21, 4
      %p39 = por %p37, %p38
      %p40 = scmp.ne.s32.totalorder %s29, %s30
      %p41 = scmp.eq.s32.totalorder %s21, 0
      %p42 = por %p40, %p41
      %p43 = scmp.ne.s32.totalorder %s29, %s30
      %p44 = scmp.eq.s32.totalorder %s22, 4
      %p45 = por %p43, %p44
      %p47 = scmp.ne.s32.totalorder %s30, %s46
      %p48 = scmp.eq.s32.totalorder %s22, 0
      %p49 = por %p47, %p48
      %s51 = sadd.s32 %s50, 1
      %p54 = scmp.eq.s32.totalorder %s16, 4
      %p55 = scmp.ne.s32.totalorder %s50, %s52
      %p56 = scmp.eq.s32.totalorder %s16, 0
      %p57 = por %p55, %p56
      %p58 = scmp.ne.s32.totalorder %s50, %s52
      %p59 = scmp.eq.s32.totalorder %s21, 4
      %p60 = por %p58, %p59
      %p61 = scmp.ne.s32.totalorder %s52, %s53
      %p62 = scmp.eq.s32.totalorder %s21, 0
      %p63 = por %p61, %p62
      %p64 = scmp.ne.s32.totalorder %s52, %s53
      %p65 = scmp.eq.s32.totalorder %s22, 4
      %p66 = por %p64, %p65
      %p68 = scmp.ne.s32.totalorder %s53, %s67
      %p69 = scmp.eq.s32.totalorder %s22, 0
      %p70 = por %p68, %p69
      %s71 = ssub.s32 %s16, %s23
      %p72 = scmp.eq.s32.totalorder %s71, 0
      %s74 = sadd.s32 %s73, 1
      %s75 = scalar_select %p72, %s73, %s74
      %p78 = pneg %p72
      %p79 = scmp.eq.s32.totalorder %s16, 4
      %p80 = por %p78, %p79
      %p81 = scmp.ne.s32.totalorder %s73, %s76
      %p82 = scmp.eq.s32.totalorder %s16, 0
      %p83 = por %p81, %p82
      %p84 = scmp.ne.s32.totalorder %s73, %s76
      %p85 = scmp.eq.s32.totalorder %s21, 4
      %p86 = por %p84, %p85
      %p87 = scmp.ne.s32.totalorder %s76, %s77
      %p88 = scmp.eq.s32.totalorder %s21, 0
      %p89 = por %p87, %p88
      %p90 = scmp.ne.s32.totalorder %s76, %s77
      %p91 = scmp.eq.s32.totalorder %s22, 4
      %p92 = por %p90, %p91
      %p94 = scmp.ne.s32.totalorder %s77, %s93
      %p95 = scmp.eq.s32.totalorder %s22, 0
      %p96 = por %p94, %p95
      %s97 = ssub.s32 %s16, %s23
      %p98 = scmp.eq.s32.totalorder %s97, 0
      %s100 = sadd.s32 %s99, 1
      %s101 = scalar_select %p98, %s99, %s100
      %p104 = pneg %p98
      %p105 = scmp.eq.s32.totalorder %s16, 4
      %p106 = por %p104, %p105
      %p107 = scmp.ne.s32.totalorder %s99, %s102
      %p108 = scmp.eq.s32.totalorder %s16, 0
      %p109 = por %p107, %p108
      %p110 = scmp.ne.s32.totalorder %s99, %s102
      %p111 = scmp.eq.s32.totalorder %s21, 4
      %p112 = por %p110, %p111
      %p113 = scmp.ne.s32.totalorder %s102, %s103
      %p114 = scmp.eq.s32.totalorder %s21, 0
      %p115 = por %p113, %p114
      %p116 = scmp.ne.s32.totalorder %s102, %s103
      %p117 = scmp.eq.s32.totalorder %s22, 4
      %p118 = por %p116, %p117
      %p120 = scmp.ne.s32.totalorder %s103, %s119
      %p121 = scmp.eq.s32.totalorder %s22, 0
      %p122 = por %p120, %p121
      %p123 = scmp.le.s32.totalorder 1, %s16
      %p124 = scmp.lt.s32.totalorder %s16, 6
      %p125 = pnand %p123, %p124
      %p126 = pneg %p125
      // Predicated region
      $region9: #{tpu_custom_call.1} parent=5 // pred_check
        _
      $region10: #{tpu_custom_call.1} parent=5 // pred_check_branch
        %128 = sbr.rel (%p125) target = $region12
      $region11: #{tpu_custom_call.1} parent=5 // pred_region
        %s129 = ssub.s32 %s16, 1
        // Predicated region
        $region13: #{tpu_custom_call.1} parent=11 // pred_check
          %p130 = pneg %p63
        $region14: #{tpu_custom_call.1} parent=11 // pred_check_branch
          %132 = sbr.rel (%p130) target = $region16
        $region15: #{tpu_custom_call.1} parent=11 // pred_region
          %s134 = ssub.s32 9216, 9216
          %135 = vsyncadd [#allocation6], %s134
          %s136 = sshll.u32 [#allocation5], 4
          %s137 = int_to_ptr.vmem [resolvable:$true] %s136
          %142 = dma.hbm_to_vmem [thread:$0]  %s1, 9216, %s137, [#allocation6], 576, 576, 36
        $region16: #{tpu_custom_call.1} parent=11 // pred_fallthru
          _
      $region12: #{tpu_custom_call.1} parent=5 // pred_fallthru
        _
      %p143 = scmp.lt.s32.totalorder %s16, 5
      // Predicated region
      $region17: #{tpu_custom_call.1} parent=5 // pred_check
        %p144 = pneg %p143
      $region18: #{tpu_custom_call.1} parent=5 // pred_check_branch
        %146 = sbr.rel (%p144) target = $region20
      $region19: #{tpu_custom_call.1} parent=5 // pred_region
        // Predicated region
        $region21: #{tpu_custom_call.1} parent=19 // pred_check
          %p147 = pneg %p36
        $region22: #{tpu_custom_call.1} parent=19 // pred_check_branch
          %149 = sbr.rel (%p147) target = $region24
        $region23: #{tpu_custom_call.1} parent=19 // pred_region
          %s150 = sand.u32 %s16, 1
          %s151 = scalar_lea.sflag [#allocation3], %s150
          %s152 = sand.u32 %s26, 1
          %s153 = smul.addr %s152, 56
          %s154 = scalar_lea.vmem [#allocation2], %s153
          %s155 = smul.u32 14, %s16
          %s156 = ssub.s32 64, %s155
          %p157 = scmp.lt.s32.totalorder %s156, 14
          %s158 = scalar_select %p157, %s156, 14
          %s159 = smul.u32 64, %s158
          %s161 = ssub.s32 896, %s159
          %162 = vsyncadd %s151, %s161
          %p163 = scmp.ne.s32.totalorder 0, %s159
          %s164 = smul.addr %s155, 64
          %s165 = scalar_lea.hbm %s0, %s164
          %s166 = smul.u32 4, %s158
          %s167 = sshll.u32 %s154, 4
          %s168 = int_to_ptr.vmem [resolvable:$true] %s167
          %s169 = sshll.u32 %s166, 4
          %173 = dma.hbm_to_vmem [thread:$0]  (%p163), %s165, %s169, %s168, %s151, 64, 64, 4
        $region24: #{tpu_custom_call.1} parent=19 // pred_fallthru
          _
        // Predicated region
        $region25: #{tpu_custom_call.1} parent=19 // pred_check
          %p174 = pneg %p83
        $region26: #{tpu_custom_call.1} parent=19 // pred_check_branch
          %176 = sbr.rel (%p174) target = $region28
        $region27: #{tpu_custom_call.1} parent=19 // pred_region
          %s177 = sand.u32 %s16, 1
          %s178 = scalar_lea.sflag [#allocation3], %s177
          %s179 = sand.u32 %s73, 1
          %s180 = smul.addr %s179, 1008
          %s181 = scalar_lea.vmem [#allocation7], %s180
          %s182 = smul.u32 14, %s16
          %s183 = ssub.s32 64, %s182
          %p184 = scmp.lt.s32.totalorder %s183, 14
          %s185 = scalar_select %p184, %s183, 14
          %s186 = smul.u32 128, %s185
          %s187 = smul.u32 %s186, 9
          %s189 = ssub.s32 16128, %s187
          %190 = vsyncadd %s178, %s189
          %p191 = scmp.ne.s32.totalorder 0, %s187
          %s192 = smul.addr %s182, 9
          %s193 = smul.addr %s192, 128
          %s194 = scalar_lea.hbm %s2, %s193
          %s195 = smul.u32 72, %s185
          %s196 = sshll.u32 %s181, 4
          %s197 = int_to_ptr.vmem [resolvable:$true] %s196
          %s198 = sshll.u32 %s195, 4
          %202 = dma.hbm_to_vmem [thread:$0]  (%p191), %s194, %s198, %s197, %s178, 1152, 1152, 72
        $region28: #{tpu_custom_call.1} parent=19 // pred_fallthru
          _
      $region20: #{tpu_custom_call.1} parent=5 // pred_fallthru
        _
      %p203 = scmp.le.s32.totalorder 1, %s16
      %p204 = scmp.lt.s32.totalorder %s16, 6
      %p205 = pnand %p203, %p204
      %p206 = pneg %p205
      // Predicated region
      $region29: #{tpu_custom_call.1} parent=5 // pred_check
        _
      $region30: #{tpu_custom_call.1} parent=5 // pred_check_branch
        %208 = sbr.rel (%p205) target = $region32
      $region31: #{tpu_custom_call.1} parent=5 // pred_region
        %s209 = ssub.s32 %s16, 1
        %s210 = sand.u32 %s21, 1
        %s211 = scalar_lea.sflag [#allocation3], %s210
        %s212 = sand.u32 %s29, 1
        %s213 = smul.addr %s212, 56
        %s214 = scalar_lea.vmem [#allocation2], %s213
        // Predicated region
        $region33: #{tpu_custom_call.1} parent=31 // pred_check
          %p215 = pneg %p42
        $region34: #{tpu_custom_call.1} parent=31 // pred_check_branch
          %217 = sbr.rel (%p215) target = $region36
        $region35: #{tpu_custom_call.1} parent=31 // pred_region
          %218 = dma.done %s211, 896
        $region36: #{tpu_custom_call.1} parent=31 // pred_fallthru
          _
        // Predicated region
        $region37: #{tpu_custom_call.1} parent=31 // pred_check
          %p219 = pneg %p63
        $region38: #{tpu_custom_call.1} parent=31 // pred_check_branch
          %221 = sbr.rel (%p219) target = $region40
        $region39: #{tpu_custom_call.1} parent=31 // pred_region
          %222 = dma.done [#allocation6], 9216
        $region40: #{tpu_custom_call.1} parent=31 // pred_fallthru
          _
        %s223 = sand.u32 %s21, 1
        %s224 = scalar_lea.sflag [#allocation3], %s223
        %s225 = sand.u32 %s76, 1
        %s226 = smul.addr %s225, 1008
        %s227 = scalar_lea.vmem [#allocation7], %s226
        // Predicated region
        $region41: #{tpu_custom_call.1} parent=31 // pred_check
          %p228 = pneg %p89
        $region42: #{tpu_custom_call.1} parent=31 // pred_check_branch
          %230 = sbr.rel (%p228) target = $region44
        $region43: #{tpu_custom_call.1} parent=31 // pred_region
          %231 = dma.done %s224, 16128
        $region44: #{tpu_custom_call.1} parent=31 // pred_fallthru
          _
        %s232 = sand.u32 %s21, 1
        %s233 = scalar_lea.sflag [#allocation3], %s232
        %s234 = sand.u32 %s29, 1
        %s235 = smul.addr %s234, 56
        %s236 = scalar_lea.vmem [#allocation2], %s235
        %p237 = pneg %p42
        %p238 = pneg %p39
        %p239 = pneg %p63
        %p240 = pneg %p60
        %s241 = sand.u32 %s21, 1
        %s242 = scalar_lea.sflag [#allocation3], %s241
        %s243 = sand.u32 %s76, 1
        %s244 = smul.addr %s243, 1008
        %s245 = scalar_lea.vmem [#allocation7], %s244
        %p246 = pneg %p89
        %p247 = pneg %p86
        %p248 = pneg %p115
        %p249 = pneg %p112
        %s250 = sand.u32 %s102, 1
        %s251 = scalar_lea.sflag [#allocation4], %s250
        %s252 = sand.u32 %s102, 1
        %s253 = smul.addr %s252, 1008
        %s254 = scalar_lea.vmem [#allocation8], %s253
        %s255 = smul.u32 14, %s21
        %s256 = ssub.s32 64, %s255
        %p257 = scmp.lt.s32.totalorder %s256, 14
        %s258 = scalar_select %p257, %s256, 14
        %s259 = smul.u32 64, %s258
        %s260 = smul.u32 14, %s21
        %s261 = ssub.s32 64, %s260
        %p262 = scmp.lt.s32.totalorder %s261, 14
        %s263 = scalar_select %p262, %s261, 14
        %s264 = smul.u32 128, %s263
        %s265 = smul.u32 %s264, 9
        %s266 = smul.u32 14, %s21
        %s267 = ssub.s32 64, %s266
        %p268 = scmp.lt.s32.totalorder %s267, 14
        %s269 = scalar_select %p268, %s267, 14
        %s270 = smul.u32 128, %s269
        %s271 = smul.u32 %s270, 9
        %v273 = vld [vmem:[%s214] sm:$0xf]
        %v274 = vld [vmem:[%s214 + $0x4] sm:$0xf]
        %v275 = vld [vmem:[%s214 + $0x8] sm:$0xf]
        %v276 = vld [vmem:[%s214 + $0xc] sm:$0xf]
        %v277 = vld [vmem:[%s214 + $0x10] sm:$0xf]
        %v278 = vld [vmem:[%s214 + $0x14] sm:$0xf]
        %v279 = vld [vmem:[%s214 + $0x18] sm:$0xf]
        %v280 = vld [vmem:[%s214 + $0x1c] sm:$0xf]
        %v281 = vld [vmem:[%s214 + $0x20] sm:$0xf]
        %v282 = vld [vmem:[%s214 + $0x24] sm:$0xf]
        %v283 = vld [vmem:[%s214 + $0x28] sm:$0xf]
        %v284 = vld [vmem:[%s214 + $0x2c] sm:$0xf]
        %v285 = vld [vmem:[%s214 + $0x30] sm:$0xf]
        %v286 = vld [vmem:[%s214 + $0x34] sm:$0xf]
        %v287 = vld [vmem:[#allocation5] sm:$0xff]
        %v288 = vld [vmem:[#allocation5 + $0x8] sm:$0xff]
        %v289 = vld [vmem:[#allocation5 + $0x10] sm:$0xff]
        %v290 = vld [vmem:[#allocation5 + $0x18] sm:$0xff]
        %v291 = vld [vmem:[#allocation5 + $0x20] sm:$0xf]
        %v292 = vld [vmem:[#allocation5 + $0x24] sm:$0xff]
        %v293 = vld [vmem:[#allocation5 + $0x2c] sm:$0xff]
        %v294 = vld [vmem:[#allocation5 + $0x34] sm:$0xff]
        %v295 = vld [vmem:[#allocation5 + $0x3c] sm:$0xff]
        %v296 = vld [vmem:[#allocation5 + $0x44] sm:$0xf]
        %v297 = vld [vmem:[#allocation5 + $0x48] sm:$0xff]
        %v298 = vld [vmem:[#allocation5 + $0x50] sm:$0xff]
        %v299 = vld [vmem:[#allocation5 + $0x58] sm:$0xff]
        %v300 = vld [vmem:[#allocation5 + $0x60] sm:$0xff]
        %v301 = vld [vmem:[#allocation5 + $0x68] sm:$0xf]
        %v302 = vld [vmem:[#allocation5 + $0x6c] sm:$0xff]
        %v303 = vld [vmem:[#allocation5 + $0x74] sm:$0xff]
        %v304 = vld [vmem:[#allocation5 + $0x7c] sm:$0xff]
        %v305 = vld [vmem:[#allocation5 + $0x84] sm:$0xff]
        %v306 = vld [vmem:[#allocation5 + $0x8c] sm:$0xf]
        %v307 = vld [vmem:[#allocation5 + $0x90] sm:$0xff]
        %v308 = vld [vmem:[#allocation5 + $0x98] sm:$0xff]
        %v309 = vld [vmem:[#allocation5 + $0xa0] sm:$0xff]
        %v310 = vld [vmem:[#allocation5 + $0xa8] sm:$0xff]
        %v311 = vld [vmem:[#allocation5 + $0xb0] sm:$0xf]
        %v312 = vld [vmem:[#allocation5 + $0xb4] sm:$0xff]
        %v313 = vld [vmem:[#allocation5 + $0xbc] sm:$0xff]
        %v314 = vld [vmem:[#allocation5 + $0xc4] sm:$0xff]
        %v315 = vld [vmem:[#allocation5 + $0xcc] sm:$0xff]
        %v316 = vld [vmem:[#allocation5 + $0xd4] sm:$0xf]
        %v317 = vld [vmem:[#allocation5 + $0xd8] sm:$0xff]
        %v318 = vld [vmem:[#allocation5 + $0xe0] sm:$0xff]
        %v319 = vld [vmem:[#allocation5 + $0xe8] sm:$0xff]
        %v320 = vld [vmem:[#allocation5 + $0xf0] sm:$0xff]
        %v321 = vld [vmem:[#allocation5 + $0xf8] sm:$0xf]
        %v322 = vld [vmem:[#allocation5 + $0xfc] sm:$0xff]
        %v323 = vld [vmem:[#allocation5 + $0x104] sm:$0xff]
        %v324 = vld [vmem:[#allocation5 + $0x10c] sm:$0xff]
        %v325 = vld [vmem:[#allocation5 + $0x114] sm:$0xff]
        %v326 = vld [vmem:[#allocation5 + $0x11c] sm:$0xf]
        %v327 = vld [vmem:[#allocation5 + $0x120] sm:$0xff]
        %v328 = vld [vmem:[#allocation5 + $0x128] sm:$0xff]
        %v329 = vld [vmem:[#allocation5 + $0x130] sm:$0xff]
        %v330 = vld [vmem:[#allocation5 + $0x138] sm:$0xff]
        %v331 = vld [vmem:[#allocation5 + $0x140] sm:$0xf]
        %v332 = vld [vmem:[#allocation5 + $0x144] sm:$0xff]
        %v333 = vld [vmem:[#allocation5 + $0x14c] sm:$0xff]
        %v334 = vld [vmem:[#allocation5 + $0x154] sm:$0xff]
        %v335 = vld [vmem:[#allocation5 + $0x15c] sm:$0xff]
        %v336 = vld [vmem:[#allocation5 + $0x164] sm:$0xf]
        %v337 = vld [vmem:[#allocation5 + $0x168] sm:$0xff]
        %v338 = vld [vmem:[#allocation5 + $0x170] sm:$0xff]
        %v339 = vld [vmem:[#allocation5 + $0x178] sm:$0xff]
        %v340 = vld [vmem:[#allocation5 + $0x180] sm:$0xff]
        %v341 = vld [vmem:[#allocation5 + $0x188] sm:$0xf]
        %v342 = vld [vmem:[#allocation5 + $0x18c] sm:$0xff]
        %v343 = vld [vmem:[#allocation5 + $0x194] sm:$0xff]
        %v344 = vld [vmem:[#allocation5 + $0x19c] sm:$0xff]
        %v345 = vld [vmem:[#allocation5 + $0x1a4] sm:$0xff]
        %v346 = vld [vmem:[#allocation5 + $0x1ac] sm:$0xf]
        %v347 = vld [vmem:[#allocation5 + $0x1b0] sm:$0xff]
        %v348 = vld [vmem:[#allocation5 + $0x1b8] sm:$0xff]
        %v349 = vld [vmem:[#allocation5 + $0x1c0] sm:$0xff]
        %v350 = vld [vmem:[#allocation5 + $0x1c8] sm:$0xff]
        %v351 = vld [vmem:[#allocation5 + $0x1d0] sm:$0xf]
        %v352 = vld [vmem:[#allocation5 + $0x1d4] sm:$0xff]
        %v353 = vld [vmem:[#allocation5 + $0x1dc] sm:$0xff]
        %v354 = vld [vmem:[#allocation5 + $0x1e4] sm:$0xff]
        %v355 = vld [vmem:[#allocation5 + $0x1ec] sm:$0xff]
        %v356 = vld [vmem:[#allocation5 + $0x1f4] sm:$0xf]
        %v357 = vld [vmem:[#allocation5 + $0x1f8] sm:$0xff]
        %v358 = vld [vmem:[#allocation5 + $0x200] sm:$0xff]
        %v359 = vld [vmem:[#allocation5 + $0x208] sm:$0xff]
        %v360 = vld [vmem:[#allocation5 + $0x210] sm:$0xff]
        %v361 = vld [vmem:[#allocation5 + $0x218] sm:$0xf]
        %v362 = vld [vmem:[#allocation5 + $0x21c] sm:$0xff]
        %v363 = vld [vmem:[#allocation5 + $0x224] sm:$0xff]
        %v364 = vld [vmem:[#allocation5 + $0x22c] sm:$0xff]
        %v365 = vld [vmem:[#allocation5 + $0x234] sm:$0xff]
        %v366 = vld [vmem:[#allocation5 + $0x23c] sm:$0xf]
        %v381 = vunpack.c.l.b16 %v273
        %v382 = vunpack.c.l.b16 %v274
        %v383 = vunpack.c.l.b16 %v275
        %v384 = vunpack.c.l.b16 %v276
        %v385 = vunpack.c.l.b16 %v277
        %v386 = vunpack.c.l.b16 %v278
        %v387 = vunpack.c.l.b16 %v279
        %v388 = vunpack.c.l.b16 %v280
        %v389 = vunpack.c.l.b16 %v281
        %v390 = vunpack.c.l.b16 %v282
        %v391 = vunpack.c.l.b16 %v283
        %v392 = vunpack.c.l.b16 %v284
        %v393 = vunpack.c.l.b16 %v285
        %v394 = vunpack.c.l.b16 %v286
        %v395 = vpack.c.b16 %v382, %v381
        %v396 = vpack.c.b16 %v384, %v383
        %v397 = vpack.c.b16 %v386, %v385
        %v398 = vpack.c.b16 %v388, %v387
        %v399 = vpack.c.b16 %v390, %v389
        %v400 = vpack.c.b16 %v392, %v391
        %v401 = vpack.c.b16 %v394, %v393
        %v489 = vunpack.c.l.b16 %v287
        %v490 = vunpack.c.h.b16 %v287
        %v491 = vunpack.c.l.b16 %v288
        %v492 = vunpack.c.h.b16 %v288
        %v493 = vunpack.c.l.b16 %v289
        %v494 = vunpack.c.h.b16 %v289
        %v495 = vunpack.c.l.b16 %v290
        %v496 = vunpack.c.h.b16 %v290
        %v497 = vunpack.c.l.b16 %v291
        %v498 = vunpack.c.l.b16 %v292
        %v499 = vunpack.c.h.b16 %v292
        %v500 = vunpack.c.l.b16 %v293
        %v501 = vunpack.c.h.b16 %v293
        %v502 = vunpack.c.l.b16 %v294
        %v503 = vunpack.c.h.b16 %v294
        %v504 = vunpack.c.l.b16 %v295
        %v505 = vunpack.c.h.b16 %v295
        %v506 = vunpack.c.l.b16 %v296
        %v507 = vunpack.c.l.b16 %v297
        %v508 = vunpack.c.h.b16 %v297
        %v509 = vunpack.c.l.b16 %v298
        %v510 = vunpack.c.h.b16 %v298
        %v511 = vunpack.c.l.b16 %v299
        %v512 = vunpack.c.h.b16 %v299
        %v513 = vunpack.c.l.b16 %v300
        %v514 = vunpack.c.h.b16 %v300
        %v515 = vunpack.c.l.b16 %v301
        %v516 = vunpack.c.l.b16 %v302
        %v517 = vunpack.c.h.b16 %v302
        %v518 = vunpack.c.l.b16 %v303
        %v519 = vunpack.c.h.b16 %v303
        %v520 = vunpack.c.l.b16 %v304
        %v521 = vunpack.c.h.b16 %v304
        %v522 = vunpack.c.l.b16 %v305
        %v523 = vunpack.c.h.b16 %v305
        %v524 = vunpack.c.l.b16 %v306
        %v525 = vunpack.c.l.b16 %v307
        %v526 = vunpack.c.h.b16 %v307
        %v527 = vunpack.c.l.b16 %v308
        %v528 = vunpack.c.h.b16 %v308
        %v529 = vunpack.c.l.b16 %v309
        %v530 = vunpack.c.h.b16 %v309
        %v531 = vunpack.c.l.b16 %v310
        %v532 = vunpack.c.h.b16 %v310
        %v533 = vunpack.c.l.b16 %v311
        %v534 = vunpack.c.l.b16 %v312
        %v535 = vunpack.c.h.b16 %v312
        %v536 = vunpack.c.l.b16 %v313
        %v537 = vunpack.c.h.b16 %v313
        %v538 = vunpack.c.l.b16 %v314
        %v539 = vunpack.c.h.b16 %v314
        %v540 = vunpack.c.l.b16 %v315
        %v541 = vunpack.c.h.b16 %v315
        %v542 = vunpack.c.l.b16 %v316
        %v543 = vunpack.c.l.b16 %v317
        %v544 = vunpack.c.h.b16 %v317
        %v545 = vunpack.c.l.b16 %v318
        %v546 = vunpack.c.h.b16 %v318
        %v547 = vunpack.c.l.b16 %v319
        %v548 = vunpack.c.h.b16 %v319
        %v549 = vunpack.c.l.b16 %v320
        %v550 = vunpack.c.h.b16 %v320
        %v551 = vunpack.c.l.b16 %v321
        %v552 = vunpack.c.l.b16 %v322
        %v553 = vunpack.c.h.b16 %v322
        %v554 = vunpack.c.l.b16 %v323
        %v555 = vunpack.c.h.b16 %v323
        %v556 = vunpack.c.l.b16 %v324
        %v557 = vunpack.c.h.b16 %v324
        %v558 = vunpack.c.l.b16 %v325
        %v559 = vunpack.c.h.b16 %v325
        %v560 = vunpack.c.l.b16 %v326
        %v561 = vunpack.c.l.b16 %v327
        %v562 = vunpack.c.h.b16 %v327
        %v563 = vunpack.c.l.b16 %v328
        %v564 = vunpack.c.h.b16 %v328
        %v565 = vunpack.c.l.b16 %v329
        %v566 = vunpack.c.h.b16 %v329
        %v567 = vunpack.c.l.b16 %v330
        %v568 = vunpack.c.h.b16 %v330
        %v569 = vunpack.c.l.b16 %v331
        %v570 = vunpack.c.l.b16 %v332
        %v571 = vunpack.c.h.b16 %v332
        %v572 = vunpack.c.l.b16 %v333
        %v573 = vunpack.c.h.b16 %v333
        %v574 = vunpack.c.l.b16 %v334
        %v575 = vunpack.c.h.b16 %v334
        %v576 = vunpack.c.l.b16 %v335
        %v577 = vunpack.c.h.b16 %v335
        %v578 = vunpack.c.l.b16 %v336
        %v579 = vunpack.c.l.b16 %v337
        %v580 = vunpack.c.h.b16 %v337
        %v581 = vunpack.c.l.b16 %v338
        %v582 = vunpack.c.h.b16 %v338
        %v583 = vunpack.c.l.b16 %v339
        %v584 = vunpack.c.h.b16 %v339
        %v585 = vunpack.c.l.b16 %v340
        %v586 = vunpack.c.h.b16 %v340
        %v587 = vunpack.c.l.b16 %v341
        %v588 = vunpack.c.l.b16 %v342
        %v589 = vunpack.c.h.b16 %v342
        %v590 = vunpack.c.l.b16 %v343
        %v591 = vunpack.c.h.b16 %v343
        %v592 = vunpack.c.l.b16 %v344
        %v593 = vunpack.c.h.b16 %v344
        %v594 = vunpack.c.l.b16 %v345
        %v595 = vunpack.c.h.b16 %v345
        %v596 = vunpack.c.l.b16 %v346
        %v597 = vunpack.c.l.b16 %v347
        %v598 = vunpack.c.h.b16 %v347
        %v599 = vunpack.c.l.b16 %v348
        %v600 = vunpack.c.h.b16 %v348
        %v601 = vunpack.c.l.b16 %v349
        %v602 = vunpack.c.h.b16 %v349
        %v603 = vunpack.c.l.b16 %v350
        %v604 = vunpack.c.h.b16 %v350
        %v605 = vunpack.c.l.b16 %v351
        %v606 = vunpack.c.l.b16 %v352
        %v607 = vunpack.c.h.b16 %v352
        %v608 = vunpack.c.l.b16 %v353
        %v609 = vunpack.c.h.b16 %v353
        %v610 = vunpack.c.l.b16 %v354
        %v611 = vunpack.c.h.b16 %v354
        %v612 = vunpack.c.l.b16 %v355
        %v613 = vunpack.c.h.b16 %v355
        %v614 = vunpack.c.l.b16 %v356
        %v615 = vunpack.c.l.b16 %v357
        %v616 = vunpack.c.h.b16 %v357
        %v617 = vunpack.c.l.b16 %v358
        %v618 = vunpack.c.h.b16 %v358
        %v619 = vunpack.c.l.b16 %v359
        %v620 = vunpack.c.h.b16 %v359
        %v621 = vunpack.c.l.b16 %v360
        %v622 = vunpack.c.h.b16 %v360
        %v623 = vunpack.c.l.b16 %v361
        %v624 = vunpack.c.l.b16 %v362
        %v625 = vunpack.c.h.b16 %v362
        %v626 = vunpack.c.l.b16 %v363
        %v627 = vunpack.c.h.b16 %v363
        %v628 = vunpack.c.l.b16 %v364
        %v629 = vunpack.c.h.b16 %v364
        %v630 = vunpack.c.l.b16 %v365
        %v631 = vunpack.c.h.b16 %v365
        %v632 = vunpack.c.l.b16 %v366
        %v633 = vpack.c.b16 %v498, %v489
        %v634 = vpack.c.b16 %v499, %v490
        %v635 = vpack.c.b16 %v500, %v491
        %v636 = vpack.c.b16 %v501, %v492
        %v637 = vpack.c.b16 %v502, %v493
        %v638 = vpack.c.b16 %v503, %v494
        %v639 = vpack.c.b16 %v504, %v495
        %v640 = vpack.c.b16 %v505, %v496
        %v641 = vpack.c.b16 %v506, %v497
        %v642 = vpack.c.b16 %v516, %v507
        %v643 = vpack.c.b16 %v517, %v508
        %v644 = vpack.c.b16 %v518, %v509
        %v645 = vpack.c.b16 %v519, %v510
        %v646 = vpack.c.b16 %v520, %v511
        %v647 = vpack.c.b16 %v521, %v512
        %v648 = vpack.c.b16 %v522, %v513
        %v649 = vpack.c.b16 %v523, %v514
        %v650 = vpack.c.b16 %v524, %v515
        %v651 = vpack.c.b16 %v534, %v525
        %v652 = vpack.c.b16 %v535, %v526
        %v653 = vpack.c.b16 %v536, %v527
        %v654 = vpack.c.b16 %v537, %v528
        %v655 = vpack.c.b16 %v538, %v529
        %v656 = vpack.c.b16 %v539, %v530
        %v657 = vpack.c.b16 %v540, %v531
        %v658 = vpack.c.b16 %v541, %v532
        %v659 = vpack.c.b16 %v542, %v533
        %v660 = vpack.c.b16 %v552, %v543
        %v661 = vpack.c.b16 %v553, %v544
        %v662 = vpack.c.b16 %v554, %v545
        %v663 = vpack.c.b16 %v555, %v546
        %v664 = vpack.c.b16 %v556, %v547
        %v665 = vpack.c.b16 %v557, %v548
        %v666 = vpack.c.b16 %v558, %v549
        %v667 = vpack.c.b16 %v559, %v550
        %v668 = vpack.c.b16 %v560, %v551
        %v669 = vpack.c.b16 %v570, %v561
        %v670 = vpack.c.b16 %v571, %v562
        %v671 = vpack.c.b16 %v572, %v563
        %v672 = vpack.c.b16 %v573, %v564
        %v673 = vpack.c.b16 %v574, %v565
        %v674 = vpack.c.b16 %v575, %v566
        %v675 = vpack.c.b16 %v576, %v567
        %v676 = vpack.c.b16 %v577, %v568
        %v677 = vpack.c.b16 %v578, %v569
        %v678 = vpack.c.b16 %v588, %v579
        %v679 = vpack.c.b16 %v589, %v580
        %v680 = vpack.c.b16 %v590, %v581
        %v681 = vpack.c.b16 %v591, %v582
        %v682 = vpack.c.b16 %v592, %v583
        %v683 = vpack.c.b16 %v593, %v584
        %v684 = vpack.c.b16 %v594, %v585
        %v685 = vpack.c.b16 %v595, %v586
        %v686 = vpack.c.b16 %v596, %v587
        %v687 = vpack.c.b16 %v606, %v597
        %v688 = vpack.c.b16 %v607, %v598
        %v689 = vpack.c.b16 %v608, %v599
        %v690 = vpack.c.b16 %v609, %v600
        %v691 = vpack.c.b16 %v610, %v601
        %v692 = vpack.c.b16 %v611, %v602
        %v693 = vpack.c.b16 %v612, %v603
        %v694 = vpack.c.b16 %v613, %v604
        %v695 = vpack.c.b16 %v614, %v605
        %v696 = vpack.c.b16 %v624, %v615
        %v697 = vpack.c.b16 %v625, %v616
        %v698 = vpack.c.b16 %v626, %v617
        %v699 = vpack.c.b16 %v627, %v618
        %v700 = vpack.c.b16 %v628, %v619
        %v701 = vpack.c.b16 %v629, %v620
        %v702 = vpack.c.b16 %v630, %v621
        %v703 = vpack.c.b16 %v631, %v622
        %v704 = vpack.c.b16 %v632, %v623
        %777 = vmatprep.subr.bf16.mxu0 %v634
        %778 = vmatpush1.bf16.msra.mxu0 %v633
        %779 = vmatprep.subr.bf16.mxu0 %v643
        %780 = vmatpush1.bf16.msra.mxu0 %v642
        %781 = vmatprep.subr.bf16.mxu0 %v652
        %782 = vmatpush1.bf16.msra.mxu0 %v651
        %783 = vmatprep.subr.bf16.mxu0 %v661
        %784 = vmatpush1.bf16.msra.mxu0 %v660
        %785 = vmatprep.subr.bf16.mxu0 %v670
        %786 = vmatpush1.bf16.msra.mxu0 %v669
        %787 = vmatprep.subr.bf16.mxu0 %v679
        %788 = vmatpush1.bf16.msra.mxu0 %v678
        %789 = vmatprep.subr.bf16.mxu0 %v688
        %790 = vmatpush1.bf16.msra.mxu0 %v687
        %791 = vmatprep.subr.bf16.mxu0 %v697
        %792 = vmatpush1.bf16.msra.mxu0 %v696
        %793 = vmatprep.subr.bf16.mxu0 0
        %794 = vmatpush1.bf16.msra.mxu0 0
        %795 = vmatprep.subr.bf16.mxu0 0
        %796 = vmatpush1.bf16.msra.mxu0 0
        %797 = vmatprep.subr.bf16.mxu0 0
        %798 = vmatpush1.bf16.msra.mxu0 0
        %799 = vmatprep.subr.bf16.mxu0 0
        %800 = vmatpush1.bf16.msra.mxu0 0
        %801 = vmatprep.subr.bf16.mxu0 0
        %802 = vmatpush1.bf16.msra.mxu0 0
        %803 = vmatprep.subr.bf16.mxu0 0
        %804 = vmatpush1.bf16.msra.mxu0 0
        %805 = vmatprep.subr.bf16.mxu0 0
        %806 = vmatpush1.bf16.msra.mxu0 0
        %807 = vmatprep.subr.bf16.mxu0 0
        %808 = vmatpush1.bf16.msra.mxu0 0
        %809 = vmatprep.mubr.bf16.mxu0 0
        %810 = vmatmul.mubr.bf16.gmra.mrb[0].mxu0 %v395
        %v811 = vpop.f32.mrb[0].mxu0
        %v812 = vadd.f32 0.0, %v811
        %v813 = vpop.f32.mrb[0].mxu0
        %v814 = vadd.f32 0.0, %v813
        %v815 = vpop.f32.mrb[0].mxu0
        %v816 = vadd.f32 0.0, %v815
        %v817 = vpop.f32.mrb[0].mxu0
        %v818 = vadd.f32 0.0, %v817
        %819 = vmatprep.mubr.bf16.mxu0 0
        %820 = vmatmul.mubr.bf16.gmra.mrb[0].mxu0 %v396
        %v821 = vpop.f32.mrb[0].mxu0
        %v822 = vadd.f32 0.0, %v821
        %v823 = vpop.f32.mrb[0].mxu0
        %v824 = vadd.f32 0.0, %v823
        %v825 = vpop.f32.mrb[0].mxu0
        %v826 = vadd.f32 0.0, %v825
        %v827 = vpop.f32.mrb[0].mxu0
        %v828 = vadd.f32 0.0, %v827
        %829 = vmatprep.mubr.bf16.mxu0 0
        %830 = vmatmul.mubr.bf16.gmra.mrb[0].mxu0 %v397
        %v831 = vpop.f32.mrb[0].mxu0
        %v832 = vadd.f32 0.0, %v831
        %v833 = vpop.f32.mrb[0].mxu0
        %v834 = vadd.f32 0.0, %v833
        %v835 = vpop.f32.mrb[0].mxu0
        %v836 = vadd.f32 0.0, %v835
        %v837 = vpop.f32.mrb[0].mxu0
        %v838 = vadd.f32 0.0, %v837
        %839 = vmatprep.mubr.bf16.mxu0 0
        %840 = vmatmul.mubr.bf16.gmra.mrb[0].mxu0 %v398
        %v841 = vpop.f32.mrb[0].mxu0
        %v842 = vadd.f32 0.0, %v841
        %v843 = vpop.f32.mrb[0].mxu0
        %v844 = vadd.f32 0.0, %v843
        %v845 = vpop.f32.mrb[0].mxu0
        %v846 = vadd.f32 0.0, %v845
        %v847 = vpop.f32.mrb[0].mxu0
        %v848 = vadd.f32 0.0, %v847
        %849 = vmatprep.mubr.bf16.mxu0 0
        %850 = vmatmul.mubr.bf16.gmra.mrb[0].mxu0 %v399
        %v851 = vpop.f32.mrb[0].mxu0
        %v852 = vadd.f32 0.0, %v851
        %v853 = vpop.f32.mrb[0].mxu0
        %v854 = vadd.f32 0.0, %v853
        %v855 = vpop.f32.mrb[0].mxu0
        %v856 = vadd.f32 0.0, %v855
        %v857 = vpop.f32.mrb[0].mxu0
        %v858 = vadd.f32 0.0, %v857
        %859 = vmatprep.mubr.bf16.mxu0 0
        %860 = vmatmul.mubr.bf16.gmra.mrb[0].mxu0 %v400
        %v861 = vpop.f32.mrb[0].mxu0
        %v862 = vadd.f32 0.0, %v861
        %v863 = vpop.f32.mrb[0].mxu0
        %v864 = vadd.f32 0.0, %v863
        %v865 = vpop.f32.mrb[0].mxu0
        %v866 = vadd.f32 0.0, %v865
        %v867 = vpop.f32.mrb[0].mxu0
        %v868 = vadd.f32 0.0, %v867
        %869 = vmatprep.mubr.bf16.mxu0 0
        %870 = vmatmul.mubr.bf16.gmra.mrb[0].mxu0 %v401
        %v871 = vpop.f32.mrb[0].mxu0
        %v872 = vadd.f32 0.0, %v871
        %v873 = vpop.f32.mrb[0].mxu0
        %v874 = vadd.f32 0.0, %v873
        %v875 = vpop.f32.mrb[0].mxu0
        %v876 = vadd.f32 0.0, %v875
        %v877 = vpop.f32.mrb[0].mxu0
        %v878 = vadd.f32 0.0, %v877
        %879 = vdwg.mxu0
        %880 = vmatprep.subr.bf16.mxu0 %v636
        %881 = vmatpush1.bf16.msra.mxu0 %v635
        %882 = vmatprep.subr.bf16.mxu0 %v645
        %883 = vmatpush1.bf16.msra.mxu0 %v644
        %884 = vmatprep.subr.bf16.mxu0 %v654
        %885 = vmatpush1.bf16.msra.mxu0 %v653
        %886 = vmatprep.subr.bf16.mxu0 %v663
        %887 = vmatpush1.bf16.msra.mxu0 %v662
        %888 = vmatprep.subr.bf16.mxu0 %v672
        %889 = vmatpush1.bf16.msra.mxu0 %v671
        %890 = vmatprep.subr.bf16.mxu0 %v681
        %891 = vmatpush1.bf16.msra.mxu0 %v680
        %892 = vmatprep.subr.bf16.mxu0 %v690
        %893 = vmatpush1.bf16.msra.mxu0 %v689
        %894 = vmatprep.subr.bf16.mxu0 %v699
        %895 = vmatpush1.bf16.msra.mxu0 %v698
        %896 = vmatprep.subr.bf16.mxu0 0
        %897 = vmatpush1.bf16.msra.mxu0 0
        %898 = vmatprep.subr.bf16.mxu0 0
        %899 = vmatpush1.bf16.msra.mxu0 0
        %900 = vmatprep.subr.bf16.mxu0 0
        %901 = vmatpush1.bf16.msra.mxu0 0
        %902 = vmatprep.subr.bf16.mxu0 0
        %903 = vmatpush1.bf16.msra.mxu0 0
        %904 = vmatprep.subr.bf16.mxu0 0
        %905 = vmatpush1.bf16.msra.mxu0 0
        %906 = vmatprep.subr.bf16.mxu0 0
        %907 = vmatpush1.bf16.msra.mxu0 0
        %908 = vmatprep.subr.bf16.mxu0 0
        %909 = vmatpush1.bf16.msra.mxu0 0
        %910 = vmatprep.subr.bf16.mxu0 0
        %911 = vmatpush1.bf16.msra.mxu0 0
        %912 = vmatprep.mubr.bf16.mxu0 0
        %913 = vmatmul.mubr.bf16.gmra.mrb[0].mxu0 %v395
        %v914 = vpop.f32.mrb[0].mxu0
        %v915 = vadd.f32 0.0, %v914
        %v916 = vpop.f32.mrb[0].mxu0
        %v917 = vadd.f32 0.0, %v916
        %v918 = vpop.f32.mrb[0].mxu0
        %v919 = vadd.f32 0.0, %v918
        %v920 = vpop.f32.mrb[0].mxu0
        %v921 = vadd.f32 0.0, %v920
        %922 = vmatprep.mubr.bf16.mxu0 0
        %923 = vmatmul.mubr.bf16.gmra.mrb[0].mxu0 %v396
        %v924 = vpop.f32.mrb[0].mxu0
        %v925 = vadd.f32 0.0, %v924
        %v926 = vpop.f32.mrb[0].mxu0
        %v927 = vadd.f32 0.0, %v926
        %v928 = vpop.f32.mrb[0].mxu0
        %v929 = vadd.f32 0.0, %v928
        %v930 = vpop.f32.mrb[0].mxu0
        %v931 = vadd.f32 0.0, %v930
        %932 = vmatprep.mubr.bf16.mxu0 0
        %933 = vmatmul.mubr.bf16.gmra.mrb[0].mxu0 %v397
        %v934 = vpop.f32.mrb[0].mxu0
        %v935 = vadd.f32 0.0, %v934
        %v936 = vpop.f32.mrb[0].mxu0
        %v937 = vadd.f32 0.0, %v936
        %v938 = vpop.f32.mrb[0].mxu0
        %v939 = vadd.f32 0.0, %v938
        %v940 = vpop.f32.mrb[0].mxu0
        %v941 = vadd.f32 0.0, %v940
        %942 = vmatprep.mubr.bf16.mxu0 0
        %943 = vmatmul.mubr.bf16.gmra.mrb[0].mxu0 %v398
        %v944 = vpop.f32.mrb[0].mxu0
        %v945 = vadd.f32 0.0, %v944
        %v946 = vpop.f32.mrb[0].mxu0
        %v947 = vadd.f32 0.0, %v946
        %v948 = vpop.f32.mrb[0].mxu0
        %v949 = vadd.f32 0.0, %v948
        %v950 = vpop.f32.mrb[0].mxu0
        %v951 = vadd.f32 0.0, %v950
        %952 = vmatprep.mubr.bf16.mxu0 0
        %953 = vmatmul.mubr.bf16.gmra.mrb[0].mxu0 %v399
        %v954 = vpop.f32.mrb[0].mxu0
        %v955 = vadd.f32 0.0, %v954
        %v956 = vpop.f32.mrb[0].mxu0
        %v957 = vadd.f32 0.0, %v956
        %v958 = vpop.f32.mrb[0].mxu0
        %v959 = vadd.f32 0.0, %v958
        %v960 = vpop.f32.mrb[0].mxu0
        %v961 = vadd.f32 0.0, %v960
        %962 = vmatprep.mubr.bf16.mxu0 0
        %963 = vmatmul.mubr.bf16.gmra.mrb[0].mxu0 %v400
        %v964 = vpop.f32.mrb[0].mxu0
        %v965 = vadd.f32 0.0, %v964
        %v966 = vpop.f32.mrb[0].mxu0
        %v967 = vadd.f32 0.0, %v966
        %v968 = vpop.f32.mrb[0].mxu0
        %v969 = vadd.f32 0.0, %v968
        %v970 = vpop.f32.mrb[0].mxu0
        %v971 = vadd.f32 0.0, %v970
        %972 = vmatprep.mubr.bf16.mxu0 0
        %973 = vmatmul.mubr.bf16.gmra.mrb[0].mxu0 %v401
        %v974 = vpop.f32.mrb[0].mxu0
        %v975 = vadd.f32 0.0, %v974
        %v976 = vpop.f32.mrb[0].mxu0
        %v977 = vadd.f32 0.0, %v976
        %v978 = vpop.f32.mrb[0].mxu0
        %v979 = vadd.f32 0.0, %v978
        %v980 = vpop.f32.mrb[0].mxu0
        %v981 = vadd.f32 0.0, %v980
        %982 = vdwg.mxu0
        %983 = vmatprep.subr.bf16.mxu0 %v638
        %984 = vmatpush1.bf16.msra.mxu0 %v637
        %985 = vmatprep.subr.bf16.mxu0 %v647
        %986 = vmatpush1.bf16.msra.mxu0 %v646
        %987 = vmatprep.subr.bf16.mxu0 %v656
        %988 = vmatpush1.bf16.msra.mxu0 %v655
        %989 = vmatprep.subr.bf16.mxu0 %v665
        %990 = vmatpush1.bf16.msra.mxu0 %v664
        %991 = vmatprep.subr.bf16.mxu0 %v674
        %992 = vmatpush1.bf16.msra.mxu0 %v673
        %993 = vmatprep.subr.bf16.mxu0 %v683
        %994 = vmatpush1.bf16.msra.mxu0 %v682
        %995 = vmatprep.subr.bf16.mxu0 %v692
        %996 = vmatpush1.bf16.msra.mxu0 %v691
        %997 = vmatprep.subr.bf16.mxu0 %v701
        %998 = vmatpush1.bf16.msra.mxu0 %v700
        %999 = vmatprep.subr.bf16.mxu0 0
        %1000 = vmatpush1.bf16.msra.mxu0 0
        %1001 = vmatprep.subr.bf16.mxu0 0
        %1002 = vmatpush1.bf16.msra.mxu0 0
        %1003 = vmatprep.subr.bf16.mxu0 0
        %1004 = vmatpush1.bf16.msra.mxu0 0
        %1005 = vmatprep.subr.bf16.mxu0 0
        %1006 = vmatpush1.bf16.msra.mxu0 0
        %1007 = vmatprep.subr.bf16.mxu0 0
        %1008 = vmatpush1.bf16.msra.mxu0 0
        %1009 = vmatprep.subr.bf16.mxu0 0
        %1010 = vmatpush1.bf16.msra.mxu0 0
        %1011 = vmatprep.subr.bf16.mxu0 0
        %1012 = vmatpush1.bf16.msra.mxu0 0
        %1013 = vmatprep.subr.bf16.mxu0 0
        %1014 = vmatpush1.bf16.msra.mxu0 0
        %1015 = vmatprep.mubr.bf16.mxu0 0
        %1016 = vmatmul.mubr.bf16.gmra.mrb[0].mxu0 %v395
        %v1017 = vpop.f32.mrb[0].mxu0
        %v1018 = vadd.f32 0.0, %v1017
        %v1019 = vpop.f32.mrb[0].mxu0
        %v1020 = vadd.f32 0.0, %v1019
        %v1021 = vpop.f32.mrb[0].mxu0
        %v1022 = vadd.f32 0.0, %v1021
        %v1023 = vpop.f32.mrb[0].mxu0
        %v1024 = vadd.f32 0.0, %v1023
        %1025 = vmatprep.mubr.bf16.mxu0 0
        %1026 = vmatmul.mubr.bf16.gmra.mrb[0].mxu0 %v396
        %v1027 = vpop.f32.mrb[0].mxu0
        %v1028 = vadd.f32 0.0, %v1027
        %v1029 = vpop.f32.mrb[0].mxu0
        %v1030 = vadd.f32 0.0, %v1029
        %v1031 = vpop.f32.mrb[0].mxu0
        %v1032 = vadd.f32 0.0, %v1031
        %v1033 = vpop.f32.mrb[0].mxu0
        %v1034 = vadd.f32 0.0, %v1033
        %1035 = vmatprep.mubr.bf16.mxu0 0
        %1036 = vmatmul.mubr.bf16.gmra.mrb[0].mxu0 %v397
        %v1037 = vpop.f32.mrb[0].mxu0
        %v1038 = vadd.f32 0.0, %v1037
        %v1039 = vpop.f32.mrb[0].mxu0
        %v1040 = vadd.f32 0.0, %v1039
        %v1041 = vpop.f32.mrb[0].mxu0
        %v1042 = vadd.f32 0.0, %v1041
        %v1043 = vpop.f32.mrb[0].mxu0
        %v1044 = vadd.f32 0.0, %v1043
        %1045 = vmatprep.mubr.bf16.mxu0 0
        %1046 = vmatmul.mubr.bf16.gmra.mrb[0].mxu0 %v398
        %v1047 = vpop.f32.mrb[0].mxu0
        %v1048 = vadd.f32 0.0, %v1047
        %v1049 = vpop.f32.mrb[0].mxu0
        %v1050 = vadd.f32 0.0, %v1049
        %v1051 = vpop.f32.mrb[0].mxu0
        %v1052 = vadd.f32 0.0, %v1051
        %v1053 = vpop.f32.mrb[0].mxu0
        %v1054 = vadd.f32 0.0, %v1053
        %1055 = vmatprep.mubr.bf16.mxu0 0
        %1056 = vmatmul.mubr.bf16.gmra.mrb[0].mxu0 %v399
        %v1057 = vpop.f32.mrb[0].mxu0
        %v1058 = vadd.f32 0.0, %v1057
        %v1059 = vpop.f32.mrb[0].mxu0
        %v1060 = vadd.f32 0.0, %v1059
        %v1061 = vpop.f32.mrb[0].mxu0
        %v1062 = vadd.f32 0.0, %v1061
        %v1063 = vpop.f32.mrb[0].mxu0
        %v1064 = vadd.f32 0.0, %v1063
        %1065 = vmatprep.mubr.bf16.mxu0 0
        %1066 = vmatmul.mubr.bf16.gmra.mrb[0].mxu0 %v400
        %v1067 = vpop.f32.mrb[0].mxu0
        %v1068 = vadd.f32 0.0, %v1067
        %v1069 = vpop.f32.mrb[0].mxu0
        %v1070 = vadd.f32 0.0, %v1069
        %v1071 = vpop.f32.mrb[0].mxu0
        %v1072 = vadd.f32 0.0, %v1071
        %v1073 = vpop.f32.mrb[0].mxu0
        %v1074 = vadd.f32 0.0, %v1073
        %1075 = vmatprep.mubr.bf16.mxu0 0
        %1076 = vmatmul.mubr.bf16.gmra.mrb[0].mxu0 %v401
        %v1077 = vpop.f32.mrb[0].mxu0
        %v1078 = vadd.f32 0.0, %v1077
        %v1079 = vpop.f32.mrb[0].mxu0
        %v1080 = vadd.f32 0.0, %v1079
        %v1081 = vpop.f32.mrb[0].mxu0
        %v1082 = vadd.f32 0.0, %v1081
        %v1083 = vpop.f32.mrb[0].mxu0
        %v1084 = vadd.f32 0.0, %v1083
        %1085 = vdwg.mxu0
        %1086 = vmatprep.subr.bf16.mxu0 %v640
        %1087 = vmatpush1.bf16.msra.mxu0 %v639
        %1088 = vmatprep.subr.bf16.mxu0 %v649
        %1089 = vmatpush1.bf16.msra.mxu0 %v648
        %1090 = vmatprep.subr.bf16.mxu0 %v658
        %1091 = vmatpush1.bf16.msra.mxu0 %v657
        %1092 = vmatprep.subr.bf16.mxu0 %v667
        %1093 = vmatpush1.bf16.msra.mxu0 %v666
        %1094 = vmatprep.subr.bf16.mxu0 %v676
        %1095 = vmatpush1.bf16.msra.mxu0 %v675
        %1096 = vmatprep.subr.bf16.mxu0 %v685
        %1097 = vmatpush1.bf16.msra.mxu0 %v684
        %1098 = vmatprep.subr.bf16.mxu0 %v694
        %1099 = vmatpush1.bf16.msra.mxu0 %v693
        %1100 = vmatprep.subr.bf16.mxu0 %v703
        %1101 = vmatpush1.bf16.msra.mxu0 %v702
        %1102 = vmatprep.subr.bf16.mxu0 0
        %1103 = vmatpush1.bf16.msra.mxu0 0
        %1104 = vmatprep.subr.bf16.mxu0 0
        %1105 = vmatpush1.bf16.msra.mxu0 0
        %1106 = vmatprep.subr.bf16.mxu0 0
        %1107 = vmatpush1.bf16.msra.mxu0 0
        %1108 = vmatprep.subr.bf16.mxu0 0
        %1109 = vmatpush1.bf16.msra.mxu0 0
        %1110 = vmatprep.subr.bf16.mxu0 0
        %1111 = vmatpush1.bf16.msra.mxu0 0
        %1112 = vmatprep.subr.bf16.mxu0 0
        %1113 = vmatpush1.bf16.msra.mxu0 0
        %1114 = vmatprep.subr.bf16.mxu0 0
        %1115 = vmatpush1.bf16.msra.mxu0 0
        %1116 = vmatprep.subr.bf16.mxu0 0
        %1117 = vmatpush1.bf16.msra.mxu0 0
        %1118 = vmatprep.mubr.bf16.mxu0 0
        %1119 = vmatmul.mubr.bf16.gmra.mrb[0].mxu0 %v395
        %v1120 = vpop.f32.mrb[0].mxu0
        %v1121 = vadd.f32 0.0, %v1120
        %v1122 = vpop.f32.mrb[0].mxu0
        %v1123 = vadd.f32 0.0, %v1122
        %v1124 = vpop.f32.mrb[0].mxu0
        %v1125 = vadd.f32 0.0, %v1124
        %v1126 = vpop.f32.mrb[0].mxu0
        %v1127 = vadd.f32 0.0, %v1126
        %1128 = vmatprep.mubr.bf16.mxu0 0
        %1129 = vmatmul.mubr.bf16.gmra.mrb[0].mxu0 %v396
        %v1130 = vpop.f32.mrb[0].mxu0
        %v1131 = vadd.f32 0.0, %v1130
        %v1132 = vpop.f32.mrb[0].mxu0
        %v1133 = vadd.f32 0.0, %v1132
        %v1134 = vpop.f32.mrb[0].mxu0
        %v1135 = vadd.f32 0.0, %v1134
        %v1136 = vpop.f32.mrb[0].mxu0
        %v1137 = vadd.f32 0.0, %v1136
        %1138 = vmatprep.mubr.bf16.mxu0 0
        %1139 = vmatmul.mubr.bf16.gmra.mrb[0].mxu0 %v397
        %v1140 = vpop.f32.mrb[0].mxu0
        %v1141 = vadd.f32 0.0, %v1140
        %v1142 = vpop.f32.mrb[0].mxu0
        %v1143 = vadd.f32 0.0, %v1142
        %v1144 = vpop.f32.mrb[0].mxu0
        %v1145 = vadd.f32 0.0, %v1144
        %v1146 = vpop.f32.mrb[0].mxu0
        %v1147 = vadd.f32 0.0, %v1146
        %1148 = vmatprep.mubr.bf16.mxu0 0
        %1149 = vmatmul.mubr.bf16.gmra.mrb[0].mxu0 %v398
        %v1150 = vpop.f32.mrb[0].mxu0
        %v1151 = vadd.f32 0.0, %v1150
        %v1152 = vpop.f32.mrb[0].mxu0
        %v1153 = vadd.f32 0.0, %v1152
        %v1154 = vpop.f32.mrb[0].mxu0
        %v1155 = vadd.f32 0.0, %v1154
        %v1156 = vpop.f32.mrb[0].mxu0
        %v1157 = vadd.f32 0.0, %v1156
        %1158 = vmatprep.mubr.bf16.mxu0 0
        %1159 = vmatmul.mubr.bf16.gmra.mrb[0].mxu0 %v399
        %v1160 = vpop.f32.mrb[0].mxu0
        %v1161 = vadd.f32 0.0, %v1160
        %v1162 = vpop.f32.mrb[0].mxu0
        %v1163 = vadd.f32 0.0, %v1162
        %v1164 = vpop.f32.mrb[0].mxu0
        %v1165 = vadd.f32 0.0, %v1164
        %v1166 = vpop.f32.mrb[0].mxu0
        %v1167 = vadd.f32 0.0, %v1166
        %1168 = vmatprep.mubr.bf16.mxu0 0
        %1169 = vmatmul.mubr.bf16.gmra.mrb[0].mxu0 %v400
        %v1170 = vpop.f32.mrb[0].mxu0
        %v1171 = vadd.f32 0.0, %v1170
        %v1172 = vpop.f32.mrb[0].mxu0
        %v1173 = vadd.f32 0.0, %v1172
        %v1174 = vpop.f32.mrb[0].mxu0
        %v1175 = vadd.f32 0.0, %v1174
        %v1176 = vpop.f32.mrb[0].mxu0
        %v1177 = vadd.f32 0.0, %v1176
        %1178 = vmatprep.mubr.bf16.mxu0 0
        %1179 = vmatmul.mubr.bf16.gmra.mrb[0].mxu0 %v401
        %v1180 = vpop.f32.mrb[0].mxu0
        %v1181 = vadd.f32 0.0, %v1180
        %v1182 = vpop.f32.mrb[0].mxu0
        %v1183 = vadd.f32 0.0, %v1182
        %v1184 = vpop.f32.mrb[0].mxu0
        %v1185 = vadd.f32 0.0, %v1184
        %v1186 = vpop.f32.mrb[0].mxu0
        %v1187 = vadd.f32 0.0, %v1186
        %1188 = vdwg.mxu0
        %1189 = vmatprep.subr.bf16.mxu0 0
        %1190 = vmatpush1.bf16.msra.mxu0 %v641
        %1191 = vmatprep.subr.bf16.mxu0 0
        %1192 = vmatpush1.bf16.msra.mxu0 %v650
        %1193 = vmatprep.subr.bf16.mxu0 0
        %1194 = vmatpush1.bf16.msra.mxu0 %v659
        %1195 = vmatprep.subr.bf16.mxu0 0
        %1196 = vmatpush1.bf16.msra.mxu0 %v668
        %1197 = vmatprep.subr.bf16.mxu0 0
        %1198 = vmatpush1.bf16.msra.mxu0 %v677
        %1199 = vmatprep.subr.bf16.mxu0 0
        %1200 = vmatpush1.bf16.msra.mxu0 %v686
        %1201 = vmatprep.subr.bf16.mxu0 0
        %1202 = vmatpush1.bf16.msra.mxu0 %v695
        %1203 = vmatprep.subr.bf16.mxu0 0
        %1204 = vmatpush1.bf16.msra.mxu0 %v704
        %1205 = vmatprep.subr.bf16.mxu0 0
        %1206 = vmatpush1.bf16.msra.mxu0 0
        %1207 = vmatprep.subr.bf16.mxu0 0
        %1208 = vmatpush1.bf16.msra.mxu0 0
        %1209 = vmatprep.subr.bf16.mxu0 0
        %1210 = vmatpush1.bf16.msra.mxu0 0
        %1211 = vmatprep.subr.bf16.mxu0 0
        %1212 = vmatpush1.bf16.msra.mxu0 0
        %1213 = vmatprep.subr.bf16.mxu0 0
        %1214 = vmatpush1.bf16.msra.mxu0 0
        %1215 = vmatprep.subr.bf16.mxu0 0
        %1216 = vmatpush1.bf16.msra.mxu0 0
        %1217 = vmatprep.subr.bf16.mxu0 0
        %1218 = vmatpush1.bf16.msra.mxu0 0
        %1219 = vmatprep.subr.bf16.mxu0 0
        %1220 = vmatpush1.bf16.msra.mxu0 0
        %1221 = vmatprep.mubr.bf16.mxu0 0
        %1222 = vmatmul.mubr.bf16.gmra.mrb[0].mxu0 %v395
        %v1223 = vpop.f32.mrb[0].mxu0
        %v1224 = vadd.f32 0.0, %v1223
        %v1225 = vpop.f32.mrb[0].mxu0
        %v1226 = vpop.f32.mrb[0].mxu0
        %v1227 = vadd.f32 0.0, %v1226
        %v1228 = vpop.f32.mrb[0].mxu0
        %1229 = vmatprep.mubr.bf16.mxu0 0
        %1230 = vmatmul.mubr.bf16.gmra.mrb[0].mxu0 %v396
        %v1231 = vpop.f32.mrb[0].mxu0
        %v1232 = vadd.f32 0.0, %v1231
        %v1233 = vpop.f32.mrb[0].mxu0
        %v1234 = vpop.f32.mrb[0].mxu0
        %v1235 = vadd.f32 0.0, %v1234
        %v1236 = vpop.f32.mrb[0].mxu0
        %1237 = vmatprep.mubr.bf16.mxu0 0
        %1238 = vmatmul.mubr.bf16.gmra.mrb[0].mxu0 %v397
        %v1239 = vpop.f32.mrb[0].mxu0
        %v1240 = vadd.f32 0.0, %v1239
        %v1241 = vpop.f32.mrb[0].mxu0
        %v1242 = vpop.f32.mrb[0].mxu0
        %v1243 = vadd.f32 0.0, %v1242
        %v1244 = vpop.f32.mrb[0].mxu0
        %1245 = vmatprep.mubr.bf16.mxu0 0
        %1246 = vmatmul.mubr.bf16.gmra.mrb[0].mxu0 %v398
        %v1247 = vpop.f32.mrb[0].mxu0
        %v1248 = vadd.f32 0.0, %v1247
        %v1249 = vpop.f32.mrb[0].mxu0
        %v1250 = vpop.f32.mrb[0].mxu0
        %v1251 = vadd.f32 0.0, %v1250
        %v1252 = vpop.f32.mrb[0].mxu0
        %1253 = vmatprep.mubr.bf16.mxu0 0
        %1254 = vmatmul.mubr.bf16.gmra.mrb[0].mxu0 %v399
        %v1255 = vpop.f32.mrb[0].mxu0
        %v1256 = vadd.f32 0.0, %v1255
        %v1257 = vpop.f32.mrb[0].mxu0
        %v1258 = vpop.f32.mrb[0].mxu0
        %v1259 = vadd.f32 0.0, %v1258
        %v1260 = vpop.f32.mrb[0].mxu0
        %1261 = vmatprep.mubr.bf16.mxu0 0
        %1262 = vmatmul.mubr.bf16.gmra.mrb[0].mxu0 %v400
        %v1263 = vpop.f32.mrb[0].mxu0
        %v1264 = vadd.f32 0.0, %v1263
        %v1265 = vpop.f32.mrb[0].mxu0
        %v1266 = vpop.f32.mrb[0].mxu0
        %v1267 = vadd.f32 0.0, %v1266
        %v1268 = vpop.f32.mrb[0].mxu0
        %1269 = vmatprep.mubr.bf16.mxu0 0
        %1270 = vmatmul.mubr.bf16.gmra.mrb[0].mxu0 %v401
        %v1271 = vpop.f32.mrb[0].mxu0
        %v1272 = vadd.f32 0.0, %v1271
        %v1273 = vpop.f32.mrb[0].mxu0
        %v1274 = vpop.f32.mrb[0].mxu0
        %v1275 = vadd.f32 0.0, %v1274
        %v1276 = vpop.f32.mrb[0].mxu0
        %1277 = vdwg.mxu0
        %v1278 = vld [vmem:[%s227] sm:$0xff]
        %v1279 = vld [vmem:[%s227 + $0x8] sm:$0xff]
        %v1280 = vld [vmem:[%s227 + $0x10] sm:$0xff]
        %v1281 = vld [vmem:[%s227 + $0x18] sm:$0xff]
        %v1282 = vld [vmem:[%s227 + $0x20] sm:$0xff]
        %v1283 = vld [vmem:[%s227 + $0x28] sm:$0xff]
        %v1284 = vld [vmem:[%s227 + $0x30] sm:$0xff]
        %v1285 = vld [vmem:[%s227 + $0x38] sm:$0xff]
        %v1286 = vld [vmem:[%s227 + $0x40] sm:$0xff]
        %v1287 = vld [vmem:[%s227 + $0x48] sm:$0xff]
        %v1288 = vld [vmem:[%s227 + $0x50] sm:$0xff]
        %v1289 = vld [vmem:[%s227 + $0x58] sm:$0xff]
        %v1290 = vld [vmem:[%s227 + $0x60] sm:$0xff]
        %v1291 = vld [vmem:[%s227 + $0x68] sm:$0xff]
        %v1292 = vld [vmem:[%s227 + $0x70] sm:$0xff]
        %v1293 = vld [vmem:[%s227 + $0x78] sm:$0xff]
        %v1294 = vld [vmem:[%s227 + $0x80] sm:$0xff]
        %v1295 = vld [vmem:[%s227 + $0x88] sm:$0xff]
        %v1296 = vld [vmem:[%s227 + $0x90] sm:$0xff]
        %v1297 = vld [vmem:[%s227 + $0x98] sm:$0xff]
        %v1298 = vld [vmem:[%s227 + $0xa0] sm:$0xff]
        %v1299 = vld [vmem:[%s227 + $0xa8] sm:$0xff]
        %v1300 = vld [vmem:[%s227 + $0xb0] sm:$0xff]
        %v1301 = vld [vmem:[%s227 + $0xb8] sm:$0xff]
        %v1302 = vld [vmem:[%s227 + $0xc0] sm:$0xff]
        %v1303 = vld [vmem:[%s227 + $0xc8] sm:$0xff]
        %v1304 = vld [vmem:[%s227 + $0xd0] sm:$0xff]
        %v1305 = vld [vmem:[%s227 + $0xd8] sm:$0xff]
        %v1306 = vld [vmem:[%s227 + $0xe0] sm:$0xff]
        %v1307 = vld [vmem:[%s227 + $0xe8] sm:$0xff]
        %v1308 = vld [vmem:[%s227 + $0xf0] sm:$0xff]
        %v1309 = vld [vmem:[%s227 + $0xf8] sm:$0xff]
        %v1310 = vld [vmem:[%s227 + $0x100] sm:$0xff]
        %v1311 = vld [vmem:[%s227 + $0x108] sm:$0xff]
        %v1312 = vld [vmem:[%s227 + $0x110] sm:$0xff]
        %v1313 = vld [vmem:[%s227 + $0x118] sm:$0xff]
        %v1314 = vld [vmem:[%s227 + $0x120] sm:$0xff]
        %v1315 = vld [vmem:[%s227 + $0x128] sm:$0xff]
        %v1316 = vld [vmem:[%s227 + $0x130] sm:$0xff]
        %v1317 = vld [vmem:[%s227 + $0x138] sm:$0xff]
        %v1318 = vld [vmem:[%s227 + $0x140] sm:$0xff]
        %v1319 = vld [vmem:[%s227 + $0x148] sm:$0xff]
        %v1320 = vld [vmem:[%s227 + $0x150] sm:$0xff]
        %v1321 = vld [vmem:[%s227 + $0x158] sm:$0xff]
        %v1322 = vld [vmem:[%s227 + $0x160] sm:$0xff]
        %v1323 = vld [vmem:[%s227 + $0x168] sm:$0xff]
        %v1324 = vld [vmem:[%s227 + $0x170] sm:$0xff]
        %v1325 = vld [vmem:[%s227 + $0x178] sm:$0xff]
        %v1326 = vld [vmem:[%s227 + $0x180] sm:$0xff]
        %v1327 = vld [vmem:[%s227 + $0x188] sm:$0xff]
        %v1328 = vld [vmem:[%s227 + $0x190] sm:$0xff]
        %v1329 = vld [vmem:[%s227 + $0x198] sm:$0xff]
        %v1330 = vld [vmem:[%s227 + $0x1a0] sm:$0xff]
        %v1331 = vld [vmem:[%s227 + $0x1a8] sm:$0xff]
        %v1332 = vld [vmem:[%s227 + $0x1b0] sm:$0xff]
        %v1333 = vld [vmem:[%s227 + $0x1b8] sm:$0xff]
        %v1334 = vld [vmem:[%s227 + $0x1c0] sm:$0xff]
        %v1335 = vld [vmem:[%s227 + $0x1c8] sm:$0xff]
        %v1336 = vld [vmem:[%s227 + $0x1d0] sm:$0xff]
        %v1337 = vld [vmem:[%s227 + $0x1d8] sm:$0xff]
        %v1338 = vld [vmem:[%s227 + $0x1e0] sm:$0xff]
        %v1339 = vld [vmem:[%s227 + $0x1e8] sm:$0xff]
        %v1340 = vld [vmem:[%s227 + $0x1f0] sm:$0xff]
        %v1341 = vld [vmem:[%s227 + $0x1f8] sm:$0xff]
        %v1342 = vld [vmem:[%s227 + $0x200] sm:$0xff]
        %v1343 = vld [vmem:[%s227 + $0x208] sm:$0xff]
        %v1344 = vld [vmem:[%s227 + $0x210] sm:$0xff]
        %v1345 = vld [vmem:[%s227 + $0x218] sm:$0xff]
        %v1346 = vld [vmem:[%s227 + $0x220] sm:$0xff]
        %v1347 = vld [vmem:[%s227 + $0x228] sm:$0xff]
        %v1348 = vld [vmem:[%s227 + $0x230] sm:$0xff]
        %v1349 = vld [vmem:[%s227 + $0x238] sm:$0xff]
        %v1350 = vld [vmem:[%s227 + $0x240] sm:$0xff]
        %v1351 = vld [vmem:[%s227 + $0x248] sm:$0xff]
        %v1352 = vld [vmem:[%s227 + $0x250] sm:$0xff]
        %v1353 = vld [vmem:[%s227 + $0x258] sm:$0xff]
        %v1354 = vld [vmem:[%s227 + $0x260] sm:$0xff]
        %v1355 = vld [vmem:[%s227 + $0x268] sm:$0xff]
        %v1356 = vld [vmem:[%s227 + $0x270] sm:$0xff]
        %v1357 = vld [vmem:[%s227 + $0x278] sm:$0xff]
        %v1358 = vld [vmem:[%s227 + $0x280] sm:$0xff]
        %v1359 = vld [vmem:[%s227 + $0x288] sm:$0xff]
        %v1360 = vld [vmem:[%s227 + $0x290] sm:$0xff]
        %v1361 = vld [vmem:[%s227 + $0x298] sm:$0xff]
        %v1362 = vld [vmem:[%s227 + $0x2a0] sm:$0xff]
        %v1363 = vld [vmem:[%s227 + $0x2a8] sm:$0xff]
        %v1364 = vld [vmem:[%s227 + $0x2b0] sm:$0xff]
        %v1365 = vld [vmem:[%s227 + $0x2b8] sm:$0xff]
        %v1366 = vld [vmem:[%s227 + $0x2c0] sm:$0xff]
        %v1367 = vld [vmem:[%s227 + $0x2c8] sm:$0xff]
        %v1368 = vld [vmem:[%s227 + $0x2d0] sm:$0xff]
        %v1369 = vld [vmem:[%s227 + $0x2d8] sm:$0xff]
        %v1370 = vld [vmem:[%s227 + $0x2e0] sm:$0xff]
        %v1371 = vld [vmem:[%s227 + $0x2e8] sm:$0xff]
        %v1372 = vld [vmem:[%s227 + $0x2f0] sm:$0xff]
        %v1373 = vld [vmem:[%s227 + $0x2f8] sm:$0xff]
        %v1374 = vld [vmem:[%s227 + $0x300] sm:$0xff]
        %v1375 = vld [vmem:[%s227 + $0x308] sm:$0xff]
        %v1376 = vld [vmem:[%s227 + $0x310] sm:$0xff]
        %v1377 = vld [vmem:[%s227 + $0x318] sm:$0xff]
        %v1378 = vld [vmem:[%s227 + $0x320] sm:$0xff]
        %v1379 = vld [vmem:[%s227 + $0x328] sm:$0xff]
        %v1380 = vld [vmem:[%s227 + $0x330] sm:$0xff]
        %v1381 = vld [vmem:[%s227 + $0x338] sm:$0xff]
        %v1382 = vld [vmem:[%s227 + $0x340] sm:$0xff]
        %v1383 = vld [vmem:[%s227 + $0x348] sm:$0xff]
        %v1384 = vld [vmem:[%s227 + $0x350] sm:$0xff]
        %v1385 = vld [vmem:[%s227 + $0x358] sm:$0xff]
        %v1386 = vld [vmem:[%s227 + $0x360] sm:$0xff]
        %v1387 = vld [vmem:[%s227 + $0x368] sm:$0xff]
        %v1388 = vld [vmem:[%s227 + $0x370] sm:$0xff]
        %v1389 = vld [vmem:[%s227 + $0x378] sm:$0xff]
        %v1390 = vld [vmem:[%s227 + $0x380] sm:$0xff]
        %v1391 = vld [vmem:[%s227 + $0x388] sm:$0xff]
        %v1392 = vld [vmem:[%s227 + $0x390] sm:$0xff]
        %v1393 = vld [vmem:[%s227 + $0x398] sm:$0xff]
        %v1394 = vld [vmem:[%s227 + $0x3a0] sm:$0xff]
        %v1395 = vld [vmem:[%s227 + $0x3a8] sm:$0xff]
        %v1396 = vld [vmem:[%s227 + $0x3b0] sm:$0xff]
        %v1397 = vld [vmem:[%s227 + $0x3b8] sm:$0xff]
        %v1398 = vld [vmem:[%s227 + $0x3c0] sm:$0xff]
        %v1399 = vld [vmem:[%s227 + $0x3c8] sm:$0xff]
        %v1400 = vld [vmem:[%s227 + $0x3d0] sm:$0xff]
        %v1401 = vld [vmem:[%s227 + $0x3d8] sm:$0xff]
        %v1402 = vld [vmem:[%s227 + $0x3e0] sm:$0xff]
        %v1403 = vld [vmem:[%s227 + $0x3e8] sm:$0xff]
        %v1404 = vmul.f32 %v812, %v1278
        %v1405 = vmul.f32 %v814, %v1279
        %v1406 = vmul.f32 %v915, %v1280
        %v1407 = vmul.f32 %v917, %v1281
        %v1408 = vmul.f32 %v1018, %v1282
        %v1409 = vmul.f32 %v1020, %v1283
        %v1410 = vmul.f32 %v1121, %v1284
        %v1411 = vmul.f32 %v1123, %v1285
        %v1412 = vmul.f32 %v1224, %v1286
        %v1413 = vmul.f32 %v816, %v1287
        %v1414 = vmul.f32 %v818, %v1288
        %v1415 = vmul.f32 %v919, %v1289
        %v1416 = vmul.f32 %v921, %v1290
        %v1417 = vmul.f32 %v1022, %v1291
        %v1418 = vmul.f32 %v1024, %v1292
        %v1419 = vmul.f32 %v1125, %v1293
        %v1420 = vmul.f32 %v1127, %v1294
        %v1421 = vmul.f32 %v1227, %v1295
        %v1422 = vmul.f32 %v822, %v1296
        %v1423 = vmul.f32 %v824, %v1297
        %v1424 = vmul.f32 %v925, %v1298
        %v1425 = vmul.f32 %v927, %v1299
        %v1426 = vmul.f32 %v1028, %v1300
        %v1427 = vmul.f32 %v1030, %v1301
        %v1428 = vmul.f32 %v1131, %v1302
        %v1429 = vmul.f32 %v1133, %v1303
        %v1430 = vmul.f32 %v1232, %v1304
        %v1431 = vmul.f32 %v826, %v1305
        %v1432 = vmul.f32 %v828, %v1306
        %v1433 = vmul.f32 %v929, %v1307
        %v1434 = vmul.f32 %v931, %v1308
        %v1435 = vmul.f32 %v1032, %v1309
        %v1436 = vmul.f32 %v1034, %v1310
        %v1437 = vmul.f32 %v1135, %v1311
        %v1438 = vmul.f32 %v1137, %v1312
        %v1439 = vmul.f32 %v1235, %v1313
        %v1440 = vmul.f32 %v832, %v1314
        %v1441 = vmul.f32 %v834, %v1315
        %v1442 = vmul.f32 %v935, %v1316
        %v1443 = vmul.f32 %v937, %v1317
        %v1444 = vmul.f32 %v1038, %v1318
        %v1445 = vmul.f32 %v1040, %v1319
        %v1446 = vmul.f32 %v1141, %v1320
        %v1447 = vmul.f32 %v1143, %v1321
        %v1448 = vmul.f32 %v1240, %v1322
        %v1449 = vmul.f32 %v836, %v1323
        %v1450 = vmul.f32 %v838, %v1324
        %v1451 = vmul.f32 %v939, %v1325
        %v1452 = vmul.f32 %v941, %v1326
        %v1453 = vmul.f32 %v1042, %v1327
        %v1454 = vmul.f32 %v1044, %v1328
        %v1455 = vmul.f32 %v1145, %v1329
        %v1456 = vmul.f32 %v1147, %v1330
        %v1457 = vmul.f32 %v1243, %v1331
        %v1458 = vmul.f32 %v842, %v1332
        %v1459 = vmul.f32 %v844, %v1333
        %v1460 = vmul.f32 %v945, %v1334
        %v1461 = vmul.f32 %v947, %v1335
        %v1462 = vmul.f32 %v1048, %v1336
        %v1463 = vmul.f32 %v1050, %v1337
        %v1464 = vmul.f32 %v1151, %v1338
        %v1465 = vmul.f32 %v1153, %v1339
        %v1466 = vmul.f32 %v1248, %v1340
        %v1467 = vmul.f32 %v846, %v1341
        %v1468 = vmul.f32 %v848, %v1342
        %v1469 = vmul.f32 %v949, %v1343
        %v1470 = vmul.f32 %v951, %v1344
        %v1471 = vmul.f32 %v1052, %v1345
        %v1472 = vmul.f32 %v1054, %v1346
        %v1473 = vmul.f32 %v1155, %v1347
        %v1474 = vmul.f32 %v1157, %v1348
        %v1475 = vmul.f32 %v1251, %v1349
        %v1476 = vmul.f32 %v852, %v1350
        %v1477 = vmul.f32 %v854, %v1351
        %v1478 = vmul.f32 %v955, %v1352
        %v1479 = vmul.f32 %v957, %v1353
        %v1480 = vmul.f32 %v1058, %v1354
        %v1481 = vmul.f32 %v1060, %v1355
        %v1482 = vmul.f32 %v1161, %v1356
        %v1483 = vmul.f32 %v1163, %v1357
        %v1484 = vmul.f32 %v1256, %v1358
        %v1485 = vmul.f32 %v856, %v1359
        %v1486 = vmul.f32 %v858, %v1360
        %v1487 = vmul.f32 %v959, %v1361
        %v1488 = vmul.f32 %v961, %v1362
        %v1489 = vmul.f32 %v1062, %v1363
        %v1490 = vmul.f32 %v1064, %v1364
        %v1491 = vmul.f32 %v1165, %v1365
        %v1492 = vmul.f32 %v1167, %v1366
        %v1493 = vmul.f32 %v1259, %v1367
        %v1494 = vmul.f32 %v862, %v1368
        %v1495 = vmul.f32 %v864, %v1369
        %v1496 = vmul.f32 %v965, %v1370
        %v1497 = vmul.f32 %v967, %v1371
        %v1498 = vmul.f32 %v1068, %v1372
        %v1499 = vmul.f32 %v1070, %v1373
        %v1500 = vmul.f32 %v1171, %v1374
        %v1501 = vmul.f32 %v1173, %v1375
        %v1502 = vmul.f32 %v1264, %v1376
        %v1503 = vmul.f32 %v866, %v1377
        %v1504 = vmul.f32 %v868, %v1378
        %v1505 = vmul.f32 %v969, %v1379
        %v1506 = vmul.f32 %v971, %v1380
        %v1507 = vmul.f32 %v1072, %v1381
        %v1508 = vmul.f32 %v1074, %v1382
        %v1509 = vmul.f32 %v1175, %v1383
        %v1510 = vmul.f32 %v1177, %v1384
        %v1511 = vmul.f32 %v1267, %v1385
        %v1512 = vmul.f32 %v872, %v1386
        %v1513 = vmul.f32 %v874, %v1387
        %v1514 = vmul.f32 %v975, %v1388
        %v1515 = vmul.f32 %v977, %v1389
        %v1516 = vmul.f32 %v1078, %v1390
        %v1517 = vmul.f32 %v1080, %v1391
        %v1518 = vmul.f32 %v1181, %v1392
        %v1519 = vmul.f32 %v1183, %v1393
        %v1520 = vmul.f32 %v1272, %v1394
        %v1521 = vmul.f32 %v876, %v1395
        %v1522 = vmul.f32 %v878, %v1396
        %v1523 = vmul.f32 %v979, %v1397
        %v1524 = vmul.f32 %v981, %v1398
        %v1525 = vmul.f32 %v1082, %v1399
        %v1526 = vmul.f32 %v1084, %v1400
        %v1527 = vmul.f32 %v1185, %v1401
        %v1528 = vmul.f32 %v1187, %v1402
        %v1529 = vmul.f32 %v1275, %v1403
        %1530 = vst [vmem:[%s254] sm:$0xff] %v1404
        %1531 = vst [vmem:[%s254 + $0x8] sm:$0xff] %v1405
        %1532 = vst [vmem:[%s254 + $0x10] sm:$0xff] %v1406
        %1533 = vst [vmem:[%s254 + $0x18] sm:$0xff] %v1407
        %1534 = vst [vmem:[%s254 + $0x20] sm:$0xff] %v1408
        %1535 = vst [vmem:[%s254 + $0x28] sm:$0xff] %v1409
        %1536 = vst [vmem:[%s254 + $0x30] sm:$0xff] %v1410
        %1537 = vst [vmem:[%s254 + $0x38] sm:$0xff] %v1411
        %1538 = vst [vmem:[%s254 + $0x40] sm:$0xff] %v1412
        %1539 = vst [vmem:[%s254 + $0x48] sm:$0xff] %v1413
        %1540 = vst [vmem:[%s254 + $0x50] sm:$0xff] %v1414
        %1541 = vst [vmem:[%s254 + $0x58] sm:$0xff] %v1415
        %1542 = vst [vmem:[%s254 + $0x60] sm:$0xff] %v1416
        %1543 = vst [vmem:[%s254 + $0x68] sm:$0xff] %v1417
        %1544 = vst [vmem:[%s254 + $0x70] sm:$0xff] %v1418
        %1545 = vst [vmem:[%s254 + $0x78] sm:$0xff] %v1419
        %1546 = vst [vmem:[%s254 + $0x80] sm:$0xff] %v1420
        %1547 = vst [vmem:[%s254 + $0x88] sm:$0xff] %v1421
        %1548 = vst [vmem:[%s254 + $0x90] sm:$0xff] %v1422
        %1549 = vst [vmem:[%s254 + $0x98] sm:$0xff] %v1423
        %1550 = vst [vmem:[%s254 + $0xa0] sm:$0xff] %v1424
        %1551 = vst [vmem:[%s254 + $0xa8] sm:$0xff] %v1425
        %1552 = vst [vmem:[%s254 + $0xb0] sm:$0xff] %v1426
        %1553 = vst [vmem:[%s254 + $0xb8] sm:$0xff] %v1427
        %1554 = vst [vmem:[%s254 + $0xc0] sm:$0xff] %v1428
        %1555 = vst [vmem:[%s254 + $0xc8] sm:$0xff] %v1429
        %1556 = vst [vmem:[%s254 + $0xd0] sm:$0xff] %v1430
        %1557 = vst [vmem:[%s254 + $0xd8] sm:$0xff] %v1431
        %1558 = vst [vmem:[%s254 + $0xe0] sm:$0xff] %v1432
        %1559 = vst [vmem:[%s254 + $0xe8] sm:$0xff] %v1433
        %1560 = vst [vmem:[%s254 + $0xf0] sm:$0xff] %v1434
        %1561 = vst [vmem:[%s254 + $0xf8] sm:$0xff] %v1435
        %1562 = vst [vmem:[%s254 + $0x100] sm:$0xff] %v1436
        %1563 = vst [vmem:[%s254 + $0x108] sm:$0xff] %v1437
        %1564 = vst [vmem:[%s254 + $0x110] sm:$0xff] %v1438
        %1565 = vst [vmem:[%s254 + $0x118] sm:$0xff] %v1439
        %1566 = vst [vmem:[%s254 + $0x120] sm:$0xff] %v1440
        %1567 = vst [vmem:[%s254 + $0x128] sm:$0xff] %v1441
        %1568 = vst [vmem:[%s254 + $0x130] sm:$0xff] %v1442
        %1569 = vst [vmem:[%s254 + $0x138] sm:$0xff] %v1443
        %1570 = vst [vmem:[%s254 + $0x140] sm:$0xff] %v1444
        %1571 = vst [vmem:[%s254 + $0x148] sm:$0xff] %v1445
        %1572 = vst [vmem:[%s254 + $0x150] sm:$0xff] %v1446
        %1573 = vst [vmem:[%s254 + $0x158] sm:$0xff] %v1447
        %1574 = vst [vmem:[%s254 + $0x160] sm:$0xff] %v1448
        %1575 = vst [vmem:[%s254 + $0x168] sm:$0xff] %v1449
        %1576 = vst [vmem:[%s254 + $0x170] sm:$0xff] %v1450
        %1577 = vst [vmem:[%s254 + $0x178] sm:$0xff] %v1451
        %1578 = vst [vmem:[%s254 + $0x180] sm:$0xff] %v1452
        %1579 = vst [vmem:[%s254 + $0x188] sm:$0xff] %v1453
        %1580 = vst [vmem:[%s254 + $0x190] sm:$0xff] %v1454
        %1581 = vst [vmem:[%s254 + $0x198] sm:$0xff] %v1455
        %1582 = vst [vmem:[%s254 + $0x1a0] sm:$0xff] %v1456
        %1583 = vst [vmem:[%s254 + $0x1a8] sm:$0xff] %v1457
        %1584 = vst [vmem:[%s254 + $0x1b0] sm:$0xff] %v1458
        %1585 = vst [vmem:[%s254 + $0x1b8] sm:$0xff] %v1459
        %1586 = vst [vmem:[%s254 + $0x1c0] sm:$0xff] %v1460
        %1587 = vst [vmem:[%s254 + $0x1c8] sm:$0xff] %v1461
        %1588 = vst [vmem:[%s254 + $0x1d0] sm:$0xff] %v1462
        %1589 = vst [vmem:[%s254 + $0x1d8] sm:$0xff] %v1463
        %1590 = vst [vmem:[%s254 + $0x1e0] sm:$0xff] %v1464
        %1591 = vst [vmem:[%s254 + $0x1e8] sm:$0xff] %v1465
        %1592 = vst [vmem:[%s254 + $0x1f0] sm:$0xff] %v1466
        %1593 = vst [vmem:[%s254 + $0x1f8] sm:$0xff] %v1467
        %1594 = vst [vmem:[%s254 + $0x200] sm:$0xff] %v1468
        %1595 = vst [vmem:[%s254 + $0x208] sm:$0xff] %v1469
        %1596 = vst [vmem:[%s254 + $0x210] sm:$0xff] %v1470
        %1597 = vst [vmem:[%s254 + $0x218] sm:$0xff] %v1471
        %1598 = vst [vmem:[%s254 + $0x220] sm:$0xff] %v1472
        %1599 = vst [vmem:[%s254 + $0x228] sm:$0xff] %v1473
        %1600 = vst [vmem:[%s254 + $0x230] sm:$0xff] %v1474
        %1601 = vst [vmem:[%s254 + $0x238] sm:$0xff] %v1475
        %1602 = vst [vmem:[%s254 + $0x240] sm:$0xff] %v1476
        %1603 = vst [vmem:[%s254 + $0x248] sm:$0xff] %v1477
        %1604 = vst [vmem:[%s254 + $0x250] sm:$0xff] %v1478
        %1605 = vst [vmem:[%s254 + $0x258] sm:$0xff] %v1479
        %1606 = vst [vmem:[%s254 + $0x260] sm:$0xff] %v1480
        %1607 = vst [vmem:[%s254 + $0x268] sm:$0xff] %v1481
        %1608 = vst [vmem:[%s254 + $0x270] sm:$0xff] %v1482
        %1609 = vst [vmem:[%s254 + $0x278] sm:$0xff] %v1483
        %1610 = vst [vmem:[%s254 + $0x280] sm:$0xff] %v1484
        %1611 = vst [vmem:[%s254 + $0x288] sm:$0xff] %v1485
        %1612 = vst [vmem:[%s254 + $0x290] sm:$0xff] %v1486
        %1613 = vst [vmem:[%s254 + $0x298] sm:$0xff] %v1487
        %1614 = vst [vmem:[%s254 + $0x2a0] sm:$0xff] %v1488
        %1615 = vst [vmem:[%s254 + $0x2a8] sm:$0xff] %v1489
        %1616 = vst [vmem:[%s254 + $0x2b0] sm:$0xff] %v1490
        %1617 = vst [vmem:[%s254 + $0x2b8] sm:$0xff] %v1491
        %1618 = vst [vmem:[%s254 + $0x2c0] sm:$0xff] %v1492
        %1619 = vst [vmem:[%s254 + $0x2c8] sm:$0xff] %v1493
        %1620 = vst [vmem:[%s254 + $0x2d0] sm:$0xff] %v1494
        %1621 = vst [vmem:[%s254 + $0x2d8] sm:$0xff] %v1495
        %1622 = vst [vmem:[%s254 + $0x2e0] sm:$0xff] %v1496
        %1623 = vst [vmem:[%s254 + $0x2e8] sm:$0xff] %v1497
        %1624 = vst [vmem:[%s254 + $0x2f0] sm:$0xff] %v1498
        %1625 = vst [vmem:[%s254 + $0x2f8] sm:$0xff] %v1499
        %1626 = vst [vmem:[%s254 + $0x300] sm:$0xff] %v1500
        %1627 = vst [vmem:[%s254 + $0x308] sm:$0xff] %v1501
        %1628 = vst [vmem:[%s254 + $0x310] sm:$0xff] %v1502
        %1629 = vst [vmem:[%s254 + $0x318] sm:$0xff] %v1503
        %1630 = vst [vmem:[%s254 + $0x320] sm:$0xff] %v1504
        %1631 = vst [vmem:[%s254 + $0x328] sm:$0xff] %v1505
        %1632 = vst [vmem:[%s254 + $0x330] sm:$0xff] %v1506
        %1633 = vst [vmem:[%s254 + $0x338] sm:$0xff] %v1507
        %1634 = vst [vmem:[%s254 + $0x340] sm:$0xff] %v1508
        %1635 = vst [vmem:[%s254 + $0x348] sm:$0xff] %v1509
        %1636 = vst [vmem:[%s254 + $0x350] sm:$0xff] %v1510
        %1637 = vst [vmem:[%s254 + $0x358] sm:$0xff] %v1511
        %1638 = vst [vmem:[%s254 + $0x360] sm:$0xff] %v1512
        %1639 = vst [vmem:[%s254 + $0x368] sm:$0xff] %v1513
        %1640 = vst [vmem:[%s254 + $0x370] sm:$0xff] %v1514
        %1641 = vst [vmem:[%s254 + $0x378] sm:$0xff] %v1515
        %1642 = vst [vmem:[%s254 + $0x380] sm:$0xff] %v1516
        %1643 = vst [vmem:[%s254 + $0x388] sm:$0xff] %v1517
        %1644 = vst [vmem:[%s254 + $0x390] sm:$0xff] %v1518
        %1645 = vst [vmem:[%s254 + $0x398] sm:$0xff] %v1519
        %1646 = vst [vmem:[%s254 + $0x3a0] sm:$0xff] %v1520
        %1647 = vst [vmem:[%s254 + $0x3a8] sm:$0xff] %v1521
        %1648 = vst [vmem:[%s254 + $0x3b0] sm:$0xff] %v1522
        %1649 = vst [vmem:[%s254 + $0x3b8] sm:$0xff] %v1523
        %1650 = vst [vmem:[%s254 + $0x3c0] sm:$0xff] %v1524
        %1651 = vst [vmem:[%s254 + $0x3c8] sm:$0xff] %v1525
        %1652 = vst [vmem:[%s254 + $0x3d0] sm:$0xff] %v1526
        %1653 = vst [vmem:[%s254 + $0x3d8] sm:$0xff] %v1527
        %1654 = vst [vmem:[%s254 + $0x3e0] sm:$0xff] %v1528
        %1655 = vst [vmem:[%s254 + $0x3e8] sm:$0xff] %v1529
        %s1656 = sand.u32 %s102, 1
        %s1657 = scalar_lea.sflag [#allocation4], %s1656
        %s1658 = sand.u32 %s102, 1
        %s1659 = smul.addr %s1658, 1008
        %s1660 = scalar_lea.vmem [#allocation8], %s1659
        // Predicated region
        $region45: #{tpu_custom_call.1} parent=31 // pred_check
          %p1661 = pneg %p112
        $region46: #{tpu_custom_call.1} parent=31 // pred_check_branch
          %1663 = sbr.rel (%p1661) target = $region48
        $region47: #{tpu_custom_call.1} parent=31 // pred_region
          %s1664 = smul.u32 14, %s21
          %s1665 = ssub.s32 64, %s1664
          %p1666 = scmp.lt.s32.totalorder %s1665, 14
          %s1667 = scalar_select %p1666, %s1665, 14
          %s1668 = smul.u32 128, %s1667
          %s1669 = smul.u32 %s1668, 9
          %s1671 = ssub.s32 16128, %s1669
          %1672 = vsyncadd %s1657, %s1671
          %p1673 = scmp.ne.s32.totalorder 0, %s1669
          %s1674 = smul.addr %s1664, 9
          %s1675 = smul.addr %s1674, 128
          %s1676 = scalar_lea.hbm %s3, %s1675
          %s1677 = smul.u32 72, %s1667
          %s1678 = sshll.u32 %s1660, 4
          %s1679 = int_to_ptr.vmem [resolvable:$true] %s1678
          %s1680 = sshll.u32 %s1677, 4
          %1684 = dma.vmem_to_hbm [thread:$0]  (%p1673), %s1679, %s1680, %s1676, %s1657, 1152, 1152, 72
        $region48: #{tpu_custom_call.1} parent=31 // pred_fallthru
          _
      $region32: #{tpu_custom_call.1} parent=5 // pred_fallthru
        _
      %p1685 = scmp.le.s32.totalorder 2, %s16
      // Predicated region
      $region49: #{tpu_custom_call.1} parent=5 // pred_check
        %p1686 = pneg %p1685
      $region50: #{tpu_custom_call.1} parent=5 // pred_check_branch
        %1688 = sbr.rel (%p1686) target = $region52
      $region51: #{tpu_custom_call.1} parent=5 // pred_region
        %s1689 = ssub.s32 %s16, 2
        // Predicated region
        $region53: #{tpu_custom_call.1} parent=51 // pred_check
          %p1690 = pneg %p118
        $region54: #{tpu_custom_call.1} parent=51 // pred_check_branch
          %1692 = sbr.rel (%p1690) target = $region56
        $region55: #{tpu_custom_call.1} parent=51 // pred_region
          %s1693 = sand.u32 %s103, 1
          %s1694 = scalar_lea.sflag [#allocation4], %s1693
          %s1695 = sand.u32 %s103, 1
          %s1696 = smul.addr %s1695, 1008
          %s1697 = scalar_lea.vmem [#allocation8], %s1696
          %1698 = dma.done %s1694, 16128
        $region56: #{tpu_custom_call.1} parent=51 // pred_fallthru
          _
      $region52: #{tpu_custom_call.1} parent=5 // pred_fallthru
        _
    $region6: #{tpu_custom_call.1} parent=1 // loop_footer
      %s20 = sadd.s32 1, %s16
    $region7: #{tpu_custom_call.1} parent=1 // loop_footer_branch
      %15 = sbr.rel target = $region3
    $region8: #{tpu_custom_call.1} parent=1 // loop_exit
      _
    %1699 = vsyncpa [#allocation3], 1
    %s1700 = scalar_lea.sflag [#allocation3], 1
    %1701 = vsyncpa %s1700, 1
    %1702 = vsyncpa [#allocation6], 1
    %1703 = vsyncpa [#allocation4], 1
    %s1704 = scalar_lea.sflag [#allocation4], 1
    %1705 = vsyncpa %s1704, 1

</llo_original>
